<compile_context>
chip_gen: v7x
topology: tpu7x:2x2x1
jax: 0.10.0
libtpu: 0.0.40
codegen_flags: <defaults>
</compile_context>

<pallas_src>
import math
from functools import partial

import jax
import jax.numpy as jnp
from jax.experimental import pallas as pl
from jax.experimental.pallas import tpu as pltpu


def _layernorm(x, gamma, beta, eps=1e-5):
    mu = jnp.mean(x, axis=-1, keepdims=True)
    var = jnp.mean((x - mu) ** 2, axis=-1, keepdims=True)
    return (x - mu) * jax.lax.rsqrt(var + eps) * gamma + beta


def _ceil_to(x, m):
    return -(-x // m) * m


def _pad_axis(x, axis, target):
    pad = target - x.shape[axis]
    if pad == 0:
        return x
    widths = [(0, 0)] * x.ndim
    widths[axis] = (0, pad)
    return jnp.pad(x, widths)


# ----------------------------------------------------------------------------
# LSTM-cell variant (InferenceNetLSTMCell)
#   per-step:  ifgo = dzh * (h @ Wh) + xz[t]   (xz precomputed in wrapper)
# ----------------------------------------------------------------------------
def _lstm_kernel(xz_ref, dzh_ref, h0_ref, c0_ref, Wh_ref,
                 gh_ref, bh_ref, gc_ref, bc_ref,
                 out_ref, h_s, c_s):
    t = pl.program_id(1)                      # time-block index (innermost)
    BT, H = h_s.shape
    TB = xz_ref.shape[0]

    @pl.when(t == 0)
    def _init():
        h_s[...] = h0_ref[...]
        c_s[...] = c0_ref[...]

    # Loop-invariant loads / broadcasts, hoisted out of the time loop.
    dzh = dzh_ref[...]                        # (BT, 4H)
    Wh = Wh_ref[...]                          # (H, 4H)
    gh = jnp.broadcast_to(gh_ref[...], (BT, H))
    bh = jnp.broadcast_to(bh_ref[...], (BT, H))
    gc = jnp.broadcast_to(gc_ref[...], (BT, H))
    bc = jnp.broadcast_to(bc_ref[...], (BT, H))

    def step(i, carry):
        h, c = carry
        ifgo = dzh * jnp.dot(h, Wh, preferred_element_type=jnp.float32) + xz_ref[i]
        i_g = jax.nn.sigmoid(ifgo[:, 0:H])
        f_g = jax.nn.sigmoid(ifgo[:, H:2 * H])
        g_g = jnp.tanh(ifgo[:, 2 * H:3 * H])
        o_g = jax.nn.sigmoid(ifgo[:, 3 * H:4 * H])
        new_c = f_g * c + i_g * g_g
        new_h = o_g * jnp.tanh(new_c)
        # TODO(synk): nn.Dropout(p=0.1) is treated as identity (eval-mode inference).
        new_h = _layernorm(new_h, gh, bh)
        new_c = _layernorm(new_c, gc, bc)
        out_ref[i] = new_h.astype(out_ref.dtype)
        return (new_h, new_c)

    h_f, c_f = jax.lax.fori_loop(0, TB, step, (h_s[...], c_s[...]), unroll=True)
    h_s[...] = h_f
    c_s[...] = c_f


# ----------------------------------------------------------------------------
# RNN-cell variant (InferenceNetRnnCell, activate='tanh')
# ----------------------------------------------------------------------------
def _rnn_kernel(xz_ref, dzh_ref, h0_ref, Wh_ref, out_ref, h_s):
    t = pl.program_id(1)
    TB = xz_ref.shape[0]

    @pl.when(t == 0)
    def _init():
        h_s[...] = h0_ref[...]

    dzh = dzh_ref[...]
    Wh = Wh_ref[...]

    def step(i, h):
        pre = dzh * jnp.dot(h, Wh, preferred_element_type=jnp.float32) + xz_ref[i]
        # TODO(synk): nn.Dropout(p=0.1) is treated as identity (eval-mode inference).
        new_h = jnp.tanh(pre)                 # activate='tanh' (default)
        out_ref[i] = new_h.astype(out_ref.dtype)
        return new_h

    h_s[...] = jax.lax.fori_loop(0, TB, step, h_s[...], unroll=True)


# ----------------------------------------------------------------------------
# Wrappers
# ----------------------------------------------------------------------------
@partial(jax.jit, static_argnames=("time_block", "batch_block"))
def inference_rnn_lstm(params, h0, c0, h_hat, inf_inputs, *,
                       time_block=8, batch_block=8):
    T, B, _ = inf_inputs.shape
    H = h0.shape[-1]
    G = 4 * H
    p = params

    # Time-invariant h_hat modulation (hoisted out of the kernel, plain XLA).
    dzh = (h_hat @ p["w_hh_w"] + p["w_hh_b"]) @ p["W_hz_w"]               # (B, 4H)
    dzx = (h_hat @ p["w_hx_w"] + p["w_hx_b"]) @ p["W_xz_w"]               # (B, 4H)
    bzb = (h_hat @ p["w_hb_w"] + p["w_hb_b"]) @ p["b_w"] + p["b_b"]       # (B, 4H)

    # Non-recurrent x path: one big matmul over all T steps, fused with all
    # time-invariant additive terms (including dzh * Wh_b).
    xz = (dzx[None] * (jnp.dot(inf_inputs, p["Wx_w"]) + p["Wx_b"])
          + bzb[None] + (dzh * p["Wh_b"])[None])                          # (T, B, 4H)

    TB, BT = time_block, batch_block
    Bp, Tp = _ceil_to(B, BT), _ceil_to(T, TB)
    xz = _pad_axis(_pad_axis(xz, 1, Bp), 0, Tp)
    dzh_p = _pad_axis(dzh, 0, Bp)
    h0_p = _pad_axis(h0, 0, Bp)
    c0_p = _pad_axis(c0, 0, Bp)

    const2 = lambda b, t: (0, 0)
    out_tbh = pl.pallas_call(
        _lstm_kernel,
        out_shape=jax.ShapeDtypeStruct((Tp, Bp, H), jnp.float32),
        grid_spec=pltpu.PrefetchScalarGridSpec(
            num_scalar_prefetch=0,
            grid=(Bp // BT, Tp // TB),
            in_specs=[
                pl.BlockSpec((TB, BT, G), lambda b, t: (t, b, 0)),   # xz
                pl.BlockSpec((BT, G), lambda b, t: (b, 0)),          # dzh
                pl.BlockSpec((BT, H), lambda b, t: (b, 0)),          # h0
                pl.BlockSpec((BT, H), lambda b, t: (b, 0)),          # c0
                pl.BlockSpec((H, G), const2),                        # Wh_w
                pl.BlockSpec((1, H), const2),                        # gamma_h
                pl.BlockSpec((1, H), const2),                        # beta_h
                pl.BlockSpec((1, H), const2),                        # gamma_c
                pl.BlockSpec((1, H), const2),                        # beta_c
            ],
            out_specs=pl.BlockSpec((TB, BT, H), lambda b, t: (t, b, 0)),
            scratch_shapes=[pltpu.VMEM((BT, H), jnp.float32),
                            pltpu.VMEM((BT, H), jnp.float32)]),
        compiler_params=pltpu.CompilerParams(
            dimension_semantics=("parallel", "arbitrary")),
    )(xz, dzh_p, h0_p, c0_p, p["Wh_w"],
      p["gamma_h"], p["beta_h"], p["gamma_c"], p["beta_c"])

    return jnp.transpose(out_tbh[:T, :B], (1, 0, 2))                  # (B, T, H)


@partial(jax.jit, static_argnames=("time_block", "batch_block"))
def inference_rnn_rnn(params, h0, h_hat, inf_inputs, *,
                      time_block=8, batch_block=8):
    T, B, _ = inf_inputs.shape
    H = h0.shape[-1]
    p = params

    dzh = (h_hat @ p["w_hh_w"] + p["w_hh_b"]) @ p["W_hz_w"]               # (B, H)
    dzx = (h_hat @ p["w_hx_w"] + p["w_hx_b"]) @ p["W_xz_w"]               # (B, H)
    bzb = (h_hat @ p["w_hb_w"] + p["w_hb_b"]) @ p["b_w"] + p["b_b"]       # (B, H)

    xz = (dzx[None] * (jnp.dot(inf_inputs, p["Wx_w"]) + p["Wx_b"])
          + bzb[None] + (dzh * p["Wh_b"])[None])                          # (T, B, H)

    TB, BT = time_block, batch_block
    Bp, Tp = _ceil_to(B, BT), _ceil_to(T, TB)
    xz = _pad_axis(_pad_axis(xz, 1, Bp), 0, Tp)
    dzh_p = _pad_axis(dzh, 0, Bp)
    h0_p = _pad_axis(h0, 0, Bp)

    const2 = lambda b, t: (0, 0)
    out_tbh = pl.pallas_call(
        _rnn_kernel,
        out_shape=jax.ShapeDtypeStruct((Tp, Bp, H), jnp.float32),
        grid_spec=pltpu.PrefetchScalarGridSpec(
            num_scalar_prefetch=0,
            grid=(Bp // BT, Tp // TB),
            in_specs=[
                pl.BlockSpec((TB, BT, H), lambda b, t: (t, b, 0)),   # xz
                pl.BlockSpec((BT, H), lambda b, t: (b, 0)),          # dzh
                pl.BlockSpec((BT, H), lambda b, t: (b, 0)),          # h0
                pl.BlockSpec((H, H), const2),                        # Wh_w
            ],
            out_specs=pl.BlockSpec((TB, BT, H), lambda b, t: (t, b, 0)),
            scratch_shapes=[pltpu.VMEM((BT, H), jnp.float32)]),
        compiler_params=pltpu.CompilerParams(
            dimension_semantics=("parallel", "arbitrary")),
    )(xz, dzh_p, h0_p, p["Wh_w"])

    return jnp.transpose(out_tbh[:T, :B], (1, 0, 2))                  # (B, T, H)


# ----------------------------------------------------------------------------
# Deterministic parameter init (PyTorch nn.Linear-style uniform)
# ----------------------------------------------------------------------------
def _init_linear(key, in_dim, out_dim, bias=True):
    bound = 1.0 / math.sqrt(in_dim)
    kw, kb = jax.random.split(key)
    w = jax.random.uniform(kw, (in_dim, out_dim), jnp.float32, -bound, bound)
    b = (jax.random.uniform(kb, (1, out_dim), jnp.float32, -bound, bound)
         if bias else None)
    return w, b


def init_params(key, z_dim, input_dim, hidden_hat_dim, hidden_dim, cell_type):
    gate = 4 * hidden_dim if cell_type == "lstm" else hidden_dim
    keys = jax.random.split(key, 8)
    p = {}
    p["w_hh_w"], p["w_hh_b"] = _init_linear(keys[0], hidden_hat_dim, z_dim)
    p["w_hx_w"], p["w_hx_b"] = _init_linear(keys[1], hidden_hat_dim, z_dim)
    p["w_hb_w"], p["w_hb_b"] = _init_linear(keys[2], hidden_hat_dim, z_dim)
    p["W_hz_w"], _ = _init_linear(keys[3], z_dim, gate, bias=False)
    p["W_xz_w"], _ = _init_linear(keys[4], z_dim, gate, bias=False)
    p["b_w"], p["b_b"] = _init_linear(keys[5], z_dim, gate)
    p["Wh_w"], p["Wh_b"] = _init_linear(keys[6], hidden_dim, gate)
    p["Wx_w"], p["Wx_b"] = _init_linear(keys[7], input_dim, gate)
    if cell_type == "lstm":
        p["gamma_h"] = jnp.ones((1, hidden_dim), jnp.float32)   # LayerNorm defaults
        p["beta_h"] = jnp.zeros((1, hidden_dim), jnp.float32)
        p["gamma_c"] = jnp.ones((1, hidden_dim), jnp.float32)
        p["beta_c"] = jnp.zeros((1, hidden_dim), jnp.float32)
    return p


# ----------------------------------------------------------------------------
# Pure-JAX references (for correctness checks)
# ----------------------------------------------------------------------------
def ref_lstm(p, h0, c0, h_hat, inf_inputs):
    dzh = (h_hat @ p["w_hh_w"] + p["w_hh_b"]) @ p["W_hz_w"]
    dzx = (h_hat @ p["w_hx_w"] + p["w_hx_b"]) @ p["W_xz_w"]
    bzb = (h_hat @ p["w_hb_w"] + p["w_hb_b"]) @ p["b_w"] + p["b_b"]
    H = h0.shape[-1]
    h, c = h0, c0
    outs = []
    for t in range(inf_inputs.shape[0]):
        ifgo = (dzh * (h @ p["Wh_w"] + p["Wh_b"])
                + dzx * (inf_inputs[t] @ p["Wx_w"] + p["Wx_b"]) + bzb)
        i = jax.nn.sigmoid(ifgo[:, 0:H])
        f = jax.nn.sigmoid(ifgo[:, H:2 * H])
        g = jnp.tanh(ifgo[:, 2 * H:3 * H])
        o = jax.nn.sigmoid(ifgo[:, 3 * H:4 * H])
        c = f * c + i * g
        h = o * jnp.tanh(c)
        h = _layernorm(h, p["gamma_h"], p["beta_h"])
        c = _layernorm(c, p["gamma_c"], p["beta_c"])
        outs.append(h)
    return jnp.stack(outs, 1)


def ref_rnn(p, h0, h_hat, inf_inputs):
    dzh = (h_hat @ p["w_hh_w"] + p["w_hh_b"]) @ p["W_hz_w"]
    dzx = (h_hat @ p["w_hx_w"] + p["w_hx_b"]) @ p["W_xz_w"]
    bzb = (h_hat @ p["w_hb_w"] + p["w_hb_b"]) @ p["b_w"] + p["b_b"]
    h = h0
    outs = []
    for t in range(inf_inputs.shape[0]):
        h = jnp.tanh(dzh * (h @ p["Wh_w"] + p["Wh_b"])
                     + dzx * (inf_inputs[t] @ p["Wx_w"] + p["Wx_b"]) + bzb)
        outs.append(h)
    return jnp.stack(outs, 1)


if __name__ == "__main__":
    B, T = 4, 8
    z_dim, input_dim, hidden_hat_dim, hidden_dim = 16, 16, 32, 32

    key = jax.random.PRNGKey(0)
    k_in, k_h, k_c, k_hat, k_pl, k_pr = jax.random.split(key, 6)

    inf_inputs = jax.random.normal(k_in, (T, B, input_dim), jnp.float32)
    h0 = jax.random.normal(k_h, (B, hidden_dim), jnp.float32)
    c0 = jax.random.normal(k_c, (B, hidden_dim), jnp.float32)
    h_hat = jax.random.normal(k_hat, (B, hidden_hat_dim), jnp.float32)

    # --- cell_type='lstm' --- (time_block=4 exercises the cross-block h/c carry)
    p_lstm = init_params(k_pl, z_dim, input_dim, hidden_hat_dim, hidden_dim, "lstm")
    out_lstm = jax.block_until_ready(
        inference_rnn_lstm(p_lstm, h0, c0, h_hat, inf_inputs, time_block=4))
    ref_l = ref_lstm(p_lstm, h0, c0, h_hat, inf_inputs)
    assert out_lstm.shape == (B, T, hidden_dim)
    assert jnp.allclose(out_lstm, ref_l, atol=1e-2, rtol=1e-2)

    # --- cell_type='rnn' ---
    p_rnn = init_params(k_pr, z_dim, input_dim, hidden_hat_dim, hidden_dim, "rnn")
    out_rnn = jax.block_until_ready(
        inference_rnn_rnn(p_rnn, h0, h_hat, inf_inputs, time_block=4))
    ref_r = ref_rnn(p_rnn, h0, h_hat, inf_inputs)
    assert out_rnn.shape == (B, T, hidden_dim)
    assert jnp.allclose(out_rnn, ref_r, atol=1e-2, rtol=1e-2)

    print("KERNEL_OK")
</pallas_src>

<mosaic_0001>
module attributes {stable_mosaic.version = 11 : i64} {
  func.func @_lstm_kernel(%arg0: i32, %arg1: i32, %arg2: memref<4x8x128xf32, #tpu.memory_space<vmem>>, %arg3: memref<8x128xf32, #tpu.memory_space<vmem>>, %arg4: memref<8x32xf32, #tpu.memory_space<vmem>>, %arg5: memref<8x32xf32, #tpu.memory_space<vmem>>, %arg6: memref<32x128xf32, #tpu.memory_space<vmem>>, %arg7: memref<1x32xf32, #tpu.memory_space<vmem>>, %arg8: memref<1x32xf32, #tpu.memory_space<vmem>>, %arg9: memref<1x32xf32, #tpu.memory_space<vmem>>, %arg10: memref<1x32xf32, #tpu.memory_space<vmem>>, %arg11: memref<4x8x32xf32, #tpu.memory_space<vmem>>, %arg12: memref<8x32xf32, #tpu.memory_space<vmem>>, %arg13: memref<8x32xf32, #tpu.memory_space<vmem>>) attributes {dimension_semantics = [#tpu.dimension_semantics<parallel>, #tpu.dimension_semantics<arbitrary>], iteration_bounds = array<i64: 1, 2>, scalar_prefetch = 0 : i64, scratch_operands = 2 : i64, tpu.core_type = #tpu.core_type<tc>, window_params = [{transform_indices = @transform_0, window_bounds = array<i64: 4, 8, 128>}, {transform_indices = @transform_1, window_bounds = array<i64: 8, 128>}, {transform_indices = @transform_2, window_bounds = array<i64: 8, 32>}, {transform_indices = @transform_3, window_bounds = array<i64: 8, 32>}, {pipeline_mode = #tpu.pipeline_mode<synchronous>, transform_indices = @transform_4, window_bounds = array<i64: 32, 128>}, {pipeline_mode = #tpu.pipeline_mode<synchronous>, transform_indices = @transform_5, window_bounds = array<i64: 1, 32>}, {pipeline_mode = #tpu.pipeline_mode<synchronous>, transform_indices = @transform_6, window_bounds = array<i64: 1, 32>}, {pipeline_mode = #tpu.pipeline_mode<synchronous>, transform_indices = @transform_7, window_bounds = array<i64: 1, 32>}, {pipeline_mode = #tpu.pipeline_mode<synchronous>, transform_indices = @transform_8, window_bounds = array<i64: 1, 32>}, {transform_indices = @transform_9, window_bounds = array<i64: 4, 8, 32>}]} {
    %c0_i32 = arith.constant 0 : i32
    %0 = arith.cmpi eq, %arg1, %c0_i32 : i32
    %1 = arith.extui %0 : i1 to i32
    %c0_i32_0 = arith.constant 0 : i32
    %2 = arith.cmpi ne, %1, %c0_i32_0 : i32
    scf.if %2 {
      %c0_92 = arith.constant 0 : index
      %c0_93 = arith.constant 0 : index
      %321 = vector.load %arg4[%c0_92, %c0_93] : memref<8x32xf32, #tpu.memory_space<vmem>>, vector<8x32xf32>
      %c0_94 = arith.constant 0 : index
      %c0_95 = arith.constant 0 : index
      %322 = vector.load %arg12[%c0_94, %c0_95] : memref<8x32xf32, #tpu.memory_space<vmem>>, vector<8x32xf32>
      tpu.vector_store %arg12[%c0_94, %c0_95], %321 {strides = array<i32>} : memref<8x32xf32, #tpu.memory_space<vmem>>, vector<8x32xf32>,
      %c0_96 = arith.constant 0 : index
      %c0_97 = arith.constant 0 : index
      %323 = vector.load %arg5[%c0_96, %c0_97] : memref<8x32xf32, #tpu.memory_space<vmem>>, vector<8x32xf32>
      %c0_98 = arith.constant 0 : index
      %c0_99 = arith.constant 0 : index
      %324 = vector.load %arg13[%c0_98, %c0_99] : memref<8x32xf32, #tpu.memory_space<vmem>>, vector<8x32xf32>
      tpu.vector_store %arg13[%c0_98, %c0_99], %323 {strides = array<i32>} : memref<8x32xf32, #tpu.memory_space<vmem>>, vector<8x32xf32>,
    } else {
    }
    %c0 = arith.constant 0 : index
    %c0_1 = arith.constant 0 : index
    %3 = vector.load %arg3[%c0, %c0_1] : memref<8x128xf32, #tpu.memory_space<vmem>>, vector<8x128xf32>
    %c0_2 = arith.constant 0 : index
    %c0_3 = arith.constant 0 : index
    %4 = vector.load %arg6[%c0_2, %c0_3] : memref<32x128xf32, #tpu.memory_space<vmem>>, vector<32x128xf32>
    %c0_4 = arith.constant 0 : index
    %c0_5 = arith.constant 0 : index
    %5 = vector.load %arg7[%c0_4, %c0_5] : memref<1x32xf32, #tpu.memory_space<vmem>>, vector<1x32xf32>
    %6 = vector.shape_cast %5 : vector<1x32xf32> to vector<1x32xf32>
    %7 = vector.broadcast %6 : vector<1x32xf32> to vector<8x32xf32>
    %c0_6 = arith.constant 0 : index
    %c0_7 = arith.constant 0 : index
    %8 = vector.load %arg8[%c0_6, %c0_7] : memref<1x32xf32, #tpu.memory_space<vmem>>, vector<1x32xf32>
    %9 = vector.shape_cast %8 : vector<1x32xf32> to vector<1x32xf32>
    %10 = vector.broadcast %9 : vector<1x32xf32> to vector<8x32xf32>
    %c0_8 = arith.constant 0 : index
    %c0_9 = arith.constant 0 : index
    %11 = vector.load %arg9[%c0_8, %c0_9] : memref<1x32xf32, #tpu.memory_space<vmem>>, vector<1x32xf32>
    %12 = vector.shape_cast %11 : vector<1x32xf32> to vector<1x32xf32>
    %13 = vector.broadcast %12 : vector<1x32xf32> to vector<8x32xf32>
    %c0_10 = arith.constant 0 : index
    %c0_11 = arith.constant 0 : index
    %14 = vector.load %arg10[%c0_10, %c0_11] : memref<1x32xf32, #tpu.memory_space<vmem>>, vector<1x32xf32>
    %15 = vector.shape_cast %14 : vector<1x32xf32> to vector<1x32xf32>
    %16 = vector.broadcast %15 : vector<1x32xf32> to vector<8x32xf32>
    %c0_12 = arith.constant 0 : index
    %c0_13 = arith.constant 0 : index
    %17 = vector.load %arg12[%c0_12, %c0_13] : memref<8x32xf32, #tpu.memory_space<vmem>>, vector<8x32xf32>
    %c0_14 = arith.constant 0 : index
    %c0_15 = arith.constant 0 : index
    %18 = vector.load %arg13[%c0_14, %c0_15] : memref<8x32xf32, #tpu.memory_space<vmem>>, vector<8x32xf32>
    %c0_i32_16 = arith.constant 0 : i32
    %cst = arith.constant dense<0.000000e+00> : vector<8x128xf32>
    %19 = tpu.matmul %17, %4, %cst {dimension_numbers = #tpu.dot_dimension_numbers<[1], [0], [0], [1], [0, 0, 1, 1], [], []>} : vector<8x32xf32>, vector<32x128xf32>, vector<8x128xf32> -> vector<8x128xf32>
    %20 = arith.mulf %3, %19 : vector<8x128xf32>
    %21 = arith.index_cast %c0_i32_16 : i32 to index
    %c0_17 = arith.constant 0 : index
    %c0_18 = arith.constant 0 : index
    %22 = vector.load %arg2[%21, %c0_17, %c0_18] : memref<4x8x128xf32, #tpu.memory_space<vmem>>, vector<1x8x128xf32>
    %23 = vector.shape_cast %22 : vector<1x8x128xf32> to vector<8x128xf32>
    %24 = arith.addf %20, %23 : vector<8x128xf32>
    %25 = vector.extract_strided_slice %24 {offsets = [0, 0], sizes = [8, 32], strides = [1, 1]} : vector<8x128xf32> to vector<8x32xf32>
    %26 = arith.negf %25 : vector<8x32xf32>
    %27 = math.exp %26 : vector<8x32xf32>
    %cst_19 = arith.constant 1.000000e+00 : f32
    %28 = vector.broadcast %cst_19 : f32 to vector<8x32xf32>
    %29 = arith.addf %28, %27 : vector<8x32xf32>
    %30 = arith.divf %28, %29 : vector<8x32xf32>
    %31 = vector.extract_strided_slice %24 {offsets = [0, 32], sizes = [8, 32], strides = [1, 1]} : vector<8x128xf32> to vector<8x32xf32>
    %32 = arith.negf %31 : vector<8x32xf32>
    %33 = math.exp %32 : vector<8x32xf32>
    %cst_20 = arith.constant 1.000000e+00 : f32
    %34 = vector.broadcast %cst_20 : f32 to vector<8x32xf32>
    %35 = arith.addf %34, %33 : vector<8x32xf32>
    %36 = arith.divf %34, %35 : vector<8x32xf32>
    %37 = vector.extract_strided_slice %24 {offsets = [0, 64], sizes = [8, 32], strides = [1, 1]} : vector<8x128xf32> to vector<8x32xf32>
    %38 = math.tanh %37 : vector<8x32xf32>
    %39 = vector.extract_strided_slice %24 {offsets = [0, 96], sizes = [8, 32], strides = [1, 1]} : vector<8x128xf32> to vector<8x32xf32>
    %40 = arith.negf %39 : vector<8x32xf32>
    %41 = math.exp %40 : vector<8x32xf32>
    %cst_21 = arith.constant 1.000000e+00 : f32
    %42 = vector.broadcast %cst_21 : f32 to vector<8x32xf32>
    %43 = arith.addf %42, %41 : vector<8x32xf32>
    %44 = arith.divf %42, %43 : vector<8x32xf32>
    %45 = arith.mulf %36, %18 : vector<8x32xf32>
    %46 = arith.mulf %30, %38 : vector<8x32xf32>
    %47 = arith.addf %45, %46 : vector<8x32xf32>
    %48 = math.tanh %47 : vector<8x32xf32>
    %49 = arith.mulf %44, %48 : vector<8x32xf32>
    %cst_22 = arith.constant dense<0.000000e+00> : vector<8xf32>
    %50 = vector.multi_reduction <add>, %49, %cst_22 [1] : vector<8x32xf32> to vector<8xf32>
    %51 = vector.shape_cast %50 : vector<8xf32> to vector<8x1xf32>
    %cst_23 = arith.constant 3.200000e+01 : f32
    %52 = vector.broadcast %cst_23 : f32 to vector<8x1xf32>
    %53 = arith.divf %51, %52 : vector<8x1xf32>
    %54 = vector.broadcast %53 : vector<8x1xf32> to vector<8x32xf32>
    %55 = arith.subf %49, %54 : vector<8x32xf32>
    %56 = arith.mulf %55, %55 : vector<8x32xf32>
    %cst_24 = arith.constant dense<0.000000e+00> : vector<8xf32>
    %57 = vector.multi_reduction <add>, %56, %cst_24 [1] : vector<8x32xf32> to vector<8xf32>
    %58 = vector.shape_cast %57 : vector<8xf32> to vector<8x1xf32>
    %cst_25 = arith.constant 3.200000e+01 : f32
    %59 = vector.broadcast %cst_25 : f32 to vector<8x1xf32>
    %60 = arith.divf %58, %59 : vector<8x1xf32>
    %61 = vector.broadcast %53 : vector<8x1xf32> to vector<8x32xf32>
    %62 = arith.subf %49, %61 : vector<8x32xf32>
    %cst_26 = arith.constant 9.99999974E-6 : f32
    %63 = vector.broadcast %cst_26 : f32 to vector<8x1xf32>
    %64 = arith.addf %60, %63 : vector<8x1xf32>
    %65 = math.rsqrt %64 : vector<8x1xf32>
    %66 = vector.broadcast %65 : vector<8x1xf32> to vector<8x32xf32>
    %67 = arith.mulf %62, %66 : vector<8x32xf32>
    %68 = arith.mulf %67, %7 : vector<8x32xf32>
    %69 = arith.addf %68, %10 : vector<8x32xf32>
    %cst_27 = arith.constant dense<0.000000e+00> : vector<8xf32>
    %70 = vector.multi_reduction <add>, %47, %cst_27 [1] : vector<8x32xf32> to vector<8xf32>
    %71 = vector.shape_cast %70 : vector<8xf32> to vector<8x1xf32>
    %cst_28 = arith.constant 3.200000e+01 : f32
    %72 = vector.broadcast %cst_28 : f32 to vector<8x1xf32>
    %73 = arith.divf %71, %72 : vector<8x1xf32>
    %74 = vector.broadcast %73 : vector<8x1xf32> to vector<8x32xf32>
    %75 = arith.subf %47, %74 : vector<8x32xf32>
    %76 = arith.mulf %75, %75 : vector<8x32xf32>
    %cst_29 = arith.constant dense<0.000000e+00> : vector<8xf32>
    %77 = vector.multi_reduction <add>, %76, %cst_29 [1] : vector<8x32xf32> to vector<8xf32>
    %78 = vector.shape_cast %77 : vector<8xf32> to vector<8x1xf32>
    %cst_30 = arith.constant 3.200000e+01 : f32
    %79 = vector.broadcast %cst_30 : f32 to vector<8x1xf32>
    %80 = arith.divf %78, %79 : vector<8x1xf32>
    %81 = vector.broadcast %73 : vector<8x1xf32> to vector<8x32xf32>
    %82 = arith.subf %47, %81 : vector<8x32xf32>
    %cst_31 = arith.constant 9.99999974E-6 : f32
    %83 = vector.broadcast %cst_31 : f32 to vector<8x1xf32>
    %84 = arith.addf %80, %83 : vector<8x1xf32>
    %85 = math.rsqrt %84 : vector<8x1xf32>
    %86 = vector.broadcast %85 : vector<8x1xf32> to vector<8x32xf32>
    %87 = arith.mulf %82, %86 : vector<8x32xf32>
    %88 = arith.mulf %87, %13 : vector<8x32xf32>
    %89 = arith.addf %88, %16 : vector<8x32xf32>
    %90 = arith.index_cast %c0_i32_16 : i32 to index
    %c0_32 = arith.constant 0 : index
    %c0_33 = arith.constant 0 : index
    %91 = vector.load %arg11[%90, %c0_32, %c0_33] : memref<4x8x32xf32, #tpu.memory_space<vmem>>, vector<1x8x32xf32>
    %92 = vector.shape_cast %91 : vector<1x8x32xf32> to vector<8x32xf32>
    %93 = vector.shape_cast %69 : vector<8x32xf32> to vector<1x8x32xf32>
    tpu.vector_store %arg11[%90, %c0_32, %c0_33], %93 {strides = array<i32>} : memref<4x8x32xf32, #tpu.memory_space<vmem>>, vector<1x8x32xf32>,
    %c1_i32 = arith.constant 1 : i32
    %cst_34 = arith.constant dense<0.000000e+00> : vector<8x128xf32>
    %94 = tpu.matmul %69, %4, %cst_34 {dimension_numbers = #tpu.dot_dimension_numbers<[1], [0], [0], [1], [0, 0, 1, 1], [], []>} : vector<8x32xf32>, vector<32x128xf32>, vector<8x128xf32> -> vector<8x128xf32>
    %95 = arith.mulf %3, %94 : vector<8x128xf32>
    %96 = arith.index_cast %c1_i32 : i32 to index
    %c0_35 = arith.constant 0 : index
    %c0_36 = arith.constant 0 : index
    %97 = vector.load %arg2[%96, %c0_35, %c0_36] : memref<4x8x128xf32, #tpu.memory_space<vmem>>, vector<1x8x128xf32>
    %98 = vector.shape_cast %97 : vector<1x8x128xf32> to vector<8x128xf32>
    %99 = arith.addf %95, %98 : vector<8x128xf32>
    %100 = vector.extract_strided_slice %99 {offsets = [0, 0], sizes = [8, 32], strides = [1, 1]} : vector<8x128xf32> to vector<8x32xf32>
    %101 = arith.negf %100 : vector<8x32xf32>
    %102 = math.exp %101 : vector<8x32xf32>
    %cst_37 = arith.constant 1.000000e+00 : f32
    %103 = vector.broadcast %cst_37 : f32 to vector<8x32xf32>
    %104 = arith.addf %103, %102 : vector<8x32xf32>
    %105 = arith.divf %103, %104 : vector<8x32xf32>
    %106 = vector.extract_strided_slice %99 {offsets = [0, 32], sizes = [8, 32], strides = [1, 1]} : vector<8x128xf32> to vector<8x32xf32>
    %107 = arith.negf %106 : vector<8x32xf32>
    %108 = math.exp %107 : vector<8x32xf32>
    %cst_38 = arith.constant 1.000000e+00 : f32
    %109 = vector.broadcast %cst_38 : f32 to vector<8x32xf32>
    %110 = arith.addf %109, %108 : vector<8x32xf32>
    %111 = arith.divf %109, %110 : vector<8x32xf32>
    %112 = vector.extract_strided_slice %99 {offsets = [0, 64], sizes = [8, 32], strides = [1, 1]} : vector<8x128xf32> to vector<8x32xf32>
    %113 = math.tanh %112 : vector<8x32xf32>
    %114 = vector.extract_strided_slice %99 {offsets = [0, 96], sizes = [8, 32], strides = [1, 1]} : vector<8x128xf32> to vector<8x32xf32>
    %115 = arith.negf %114 : vector<8x32xf32>
    %116 = math.exp %115 : vector<8x32xf32>
    %cst_39 = arith.constant 1.000000e+00 : f32
    %117 = vector.broadcast %cst_39 : f32 to vector<8x32xf32>
    %118 = arith.addf %117, %116 : vector<8x32xf32>
    %119 = arith.divf %117, %118 : vector<8x32xf32>
    %120 = arith.mulf %111, %89 : vector<8x32xf32>
    %121 = arith.mulf %105, %113 : vector<8x32xf32>
    %122 = arith.addf %120, %121 : vector<8x32xf32>
    %123 = math.tanh %122 : vector<8x32xf32>
    %124 = arith.mulf %119, %123 : vector<8x32xf32>
    %cst_40 = arith.constant dense<0.000000e+00> : vector<8xf32>
    %125 = vector.multi_reduction <add>, %124, %cst_40 [1] : vector<8x32xf32> to vector<8xf32>
    %126 = vector.shape_cast %125 : vector<8xf32> to vector<8x1xf32>
    %cst_41 = arith.constant 3.200000e+01 : f32
    %127 = vector.broadcast %cst_41 : f32 to vector<8x1xf32>
    %128 = arith.divf %126, %127 : vector<8x1xf32>
    %129 = vector.broadcast %128 : vector<8x1xf32> to vector<8x32xf32>
    %130 = arith.subf %124, %129 : vector<8x32xf32>
    %131 = arith.mulf %130, %130 : vector<8x32xf32>
    %cst_42 = arith.constant dense<0.000000e+00> : vector<8xf32>
    %132 = vector.multi_reduction <add>, %131, %cst_42 [1] : vector<8x32xf32> to vector<8xf32>
    %133 = vector.shape_cast %132 : vector<8xf32> to vector<8x1xf32>
    %cst_43 = arith.constant 3.200000e+01 : f32
    %134 = vector.broadcast %cst_43 : f32 to vector<8x1xf32>
    %135 = arith.divf %133, %134 : vector<8x1xf32>
    %136 = vector.broadcast %128 : vector<8x1xf32> to vector<8x32xf32>
    %137 = arith.subf %124, %136 : vector<8x32xf32>
    %cst_44 = arith.constant 9.99999974E-6 : f32
    %138 = vector.broadcast %cst_44 : f32 to vector<8x1xf32>
    %139 = arith.addf %135, %138 : vector<8x1xf32>
    %140 = math.rsqrt %139 : vector<8x1xf32>
    %141 = vector.broadcast %140 : vector<8x1xf32> to vector<8x32xf32>
    %142 = arith.mulf %137, %141 : vector<8x32xf32>
    %143 = arith.mulf %142, %7 : vector<8x32xf32>
    %144 = arith.addf %143, %10 : vector<8x32xf32>
    %cst_45 = arith.constant dense<0.000000e+00> : vector<8xf32>
    %145 = vector.multi_reduction <add>, %122, %cst_45 [1] : vector<8x32xf32> to vector<8xf32>
    %146 = vector.shape_cast %145 : vector<8xf32> to vector<8x1xf32>
    %cst_46 = arith.constant 3.200000e+01 : f32
    %147 = vector.broadcast %cst_46 : f32 to vector<8x1xf32>
    %148 = arith.divf %146, %147 : vector<8x1xf32>
    %149 = vector.broadcast %148 : vector<8x1xf32> to vector<8x32xf32>
    %150 = arith.subf %122, %149 : vector<8x32xf32>
    %151 = arith.mulf %150, %150 : vector<8x32xf32>
    %cst_47 = arith.constant dense<0.000000e+00> : vector<8xf32>
    %152 = vector.multi_reduction <add>, %151, %cst_47 [1] : vector<8x32xf32> to vector<8xf32>
    %153 = vector.shape_cast %152 : vector<8xf32> to vector<8x1xf32>
    %cst_48 = arith.constant 3.200000e+01 : f32
    %154 = vector.broadcast %cst_48 : f32 to vector<8x1xf32>
    %155 = arith.divf %153, %154 : vector<8x1xf32>
    %156 = vector.broadcast %148 : vector<8x1xf32> to vector<8x32xf32>
    %157 = arith.subf %122, %156 : vector<8x32xf32>
    %cst_49 = arith.constant 9.99999974E-6 : f32
    %158 = vector.broadcast %cst_49 : f32 to vector<8x1xf32>
    %159 = arith.addf %155, %158 : vector<8x1xf32>
    %160 = math.rsqrt %159 : vector<8x1xf32>
    %161 = vector.broadcast %160 : vector<8x1xf32> to vector<8x32xf32>
    %162 = arith.mulf %157, %161 : vector<8x32xf32>
    %163 = arith.mulf %162, %13 : vector<8x32xf32>
    %164 = arith.addf %163, %16 : vector<8x32xf32>
    %165 = arith.index_cast %c1_i32 : i32 to index
    %c0_50 = arith.constant 0 : index
    %c0_51 = arith.constant 0 : index
    %166 = vector.load %arg11[%165, %c0_50, %c0_51] : memref<4x8x32xf32, #tpu.memory_space<vmem>>, vector<1x8x32xf32>
    %167 = vector.shape_cast %166 : vector<1x8x32xf32> to vector<8x32xf32>
    %168 = vector.shape_cast %144 : vector<8x32xf32> to vector<1x8x32xf32>
    tpu.vector_store %arg11[%165, %c0_50, %c0_51], %168 {strides = array<i32>} : memref<4x8x32xf32, #tpu.memory_space<vmem>>, vector<1x8x32xf32>,
    %c2_i32 = arith.constant 2 : i32
    %cst_52 = arith.constant dense<0.000000e+00> : vector<8x128xf32>
    %169 = tpu.matmul %144, %4, %cst_52 {dimension_numbers = #tpu.dot_dimension_numbers<[1], [0], [0], [1], [0, 0, 1, 1], [], []>} : vector<8x32xf32>, vector<32x128xf32>, vector<8x128xf32> -> vector<8x128xf32>
    %170 = arith.mulf %3, %169 : vector<8x128xf32>
    %171 = arith.index_cast %c2_i32 : i32 to index
    %c0_53 = arith.constant 0 : index
    %c0_54 = arith.constant 0 : index
    %172 = vector.load %arg2[%171, %c0_53, %c0_54] : memref<4x8x128xf32, #tpu.memory_space<vmem>>, vector<1x8x128xf32>
    %173 = vector.shape_cast %172 : vector<1x8x128xf32> to vector<8x128xf32>
    %174 = arith.addf %170, %173 : vector<8x128xf32>
    %175 = vector.extract_strided_slice %174 {offsets = [0, 0], sizes = [8, 32], strides = [1, 1]} : vector<8x128xf32> to vector<8x32xf32>
    %176 = arith.negf %175 : vector<8x32xf32>
    %177 = math.exp %176 : vector<8x32xf32>
    %cst_55 = arith.constant 1.000000e+00 : f32
    %178 = vector.broadcast %cst_55 : f32 to vector<8x32xf32>
    %179 = arith.addf %178, %177 : vector<8x32xf32>
    %180 = arith.divf %178, %179 : vector<8x32xf32>
    %181 = vector.extract_strided_slice %174 {offsets = [0, 32], sizes = [8, 32], strides = [1, 1]} : vector<8x128xf32> to vector<8x32xf32>
    %182 = arith.negf %181 : vector<8x32xf32>
    %183 = math.exp %182 : vector<8x32xf32>
    %cst_56 = arith.constant 1.000000e+00 : f32
    %184 = vector.broadcast %cst_56 : f32 to vector<8x32xf32>
    %185 = arith.addf %184, %183 : vector<8x32xf32>
    %186 = arith.divf %184, %185 : vector<8x32xf32>
    %187 = vector.extract_strided_slice %174 {offsets = [0, 64], sizes = [8, 32], strides = [1, 1]} : vector<8x128xf32> to vector<8x32xf32>
    %188 = math.tanh %187 : vector<8x32xf32>
    %189 = vector.extract_strided_slice %174 {offsets = [0, 96], sizes = [8, 32], strides = [1, 1]} : vector<8x128xf32> to vector<8x32xf32>
    %190 = arith.negf %189 : vector<8x32xf32>
    %191 = math.exp %190 : vector<8x32xf32>
    %cst_57 = arith.constant 1.000000e+00 : f32
    %192 = vector.broadcast %cst_57 : f32 to vector<8x32xf32>
    %193 = arith.addf %192, %191 : vector<8x32xf32>
    %194 = arith.divf %192, %193 : vector<8x32xf32>
    %195 = arith.mulf %186, %164 : vector<8x32xf32>
    %196 = arith.mulf %180, %188 : vector<8x32xf32>
    %197 = arith.addf %195, %196 : vector<8x32xf32>
    %198 = math.tanh %197 : vector<8x32xf32>
    %199 = arith.mulf %194, %198 : vector<8x32xf32>
    %cst_58 = arith.constant dense<0.000000e+00> : vector<8xf32>
    %200 = vector.multi_reduction <add>, %199, %cst_58 [1] : vector<8x32xf32> to vector<8xf32>
    %201 = vector.shape_cast %200 : vector<8xf32> to vector<8x1xf32>
    %cst_59 = arith.constant 3.200000e+01 : f32
    %202 = vector.broadcast %cst_59 : f32 to vector<8x1xf32>
    %203 = arith.divf %201, %202 : vector<8x1xf32>
    %204 = vector.broadcast %203 : vector<8x1xf32> to vector<8x32xf32>
    %205 = arith.subf %199, %204 : vector<8x32xf32>
    %206 = arith.mulf %205, %205 : vector<8x32xf32>
    %cst_60 = arith.constant dense<0.000000e+00> : vector<8xf32>
    %207 = vector.multi_reduction <add>, %206, %cst_60 [1] : vector<8x32xf32> to vector<8xf32>
    %208 = vector.shape_cast %207 : vector<8xf32> to vector<8x1xf32>
    %cst_61 = arith.constant 3.200000e+01 : f32
    %209 = vector.broadcast %cst_61 : f32 to vector<8x1xf32>
    %210 = arith.divf %208, %209 : vector<8x1xf32>
    %211 = vector.broadcast %203 : vector<8x1xf32> to vector<8x32xf32>
    %212 = arith.subf %199, %211 : vector<8x32xf32>
    %cst_62 = arith.constant 9.99999974E-6 : f32
    %213 = vector.broadcast %cst_62 : f32 to vector<8x1xf32>
    %214 = arith.addf %210, %213 : vector<8x1xf32>
    %215 = math.rsqrt %214 : vector<8x1xf32>
    %216 = vector.broadcast %215 : vector<8x1xf32> to vector<8x32xf32>
    %217 = arith.mulf %212, %216 : vector<8x32xf32>
    %218 = arith.mulf %217, %7 : vector<8x32xf32>
    %219 = arith.addf %218, %10 : vector<8x32xf32>
    %cst_63 = arith.constant dense<0.000000e+00> : vector<8xf32>
    %220 = vector.multi_reduction <add>, %197, %cst_63 [1] : vector<8x32xf32> to vector<8xf32>
    %221 = vector.shape_cast %220 : vector<8xf32> to vector<8x1xf32>
    %cst_64 = arith.constant 3.200000e+01 : f32
    %222 = vector.broadcast %cst_64 : f32 to vector<8x1xf32>
    %223 = arith.divf %221, %222 : vector<8x1xf32>
    %224 = vector.broadcast %223 : vector<8x1xf32> to vector<8x32xf32>
    %225 = arith.subf %197, %224 : vector<8x32xf32>
    %226 = arith.mulf %225, %225 : vector<8x32xf32>
    %cst_65 = arith.constant dense<0.000000e+00> : vector<8xf32>
    %227 = vector.multi_reduction <add>, %226, %cst_65 [1] : vector<8x32xf32> to vector<8xf32>
    %228 = vector.shape_cast %227 : vector<8xf32> to vector<8x1xf32>
    %cst_66 = arith.constant 3.200000e+01 : f32
    %229 = vector.broadcast %cst_66 : f32 to vector<8x1xf32>
    %230 = arith.divf %228, %229 : vector<8x1xf32>
    %231 = vector.broadcast %223 : vector<8x1xf32> to vector<8x32xf32>
    %232 = arith.subf %197, %231 : vector<8x32xf32>
    %cst_67 = arith.constant 9.99999974E-6 : f32
    %233 = vector.broadcast %cst_67 : f32 to vector<8x1xf32>
    %234 = arith.addf %230, %233 : vector<8x1xf32>
    %235 = math.rsqrt %234 : vector<8x1xf32>
    %236 = vector.broadcast %235 : vector<8x1xf32> to vector<8x32xf32>
    %237 = arith.mulf %232, %236 : vector<8x32xf32>
    %238 = arith.mulf %237, %13 : vector<8x32xf32>
    %239 = arith.addf %238, %16 : vector<8x32xf32>
    %240 = arith.index_cast %c2_i32 : i32 to index
    %c0_68 = arith.constant 0 : index
    %c0_69 = arith.constant 0 : index
    %241 = vector.load %arg11[%240, %c0_68, %c0_69] : memref<4x8x32xf32, #tpu.memory_space<vmem>>, vector<1x8x32xf32>
    %242 = vector.shape_cast %241 : vector<1x8x32xf32> to vector<8x32xf32>
    %243 = vector.shape_cast %219 : vector<8x32xf32> to vector<1x8x32xf32>
    tpu.vector_store %arg11[%240, %c0_68, %c0_69], %243 {strides = array<i32>} : memref<4x8x32xf32, #tpu.memory_space<vmem>>, vector<1x8x32xf32>,
    %c3_i32 = arith.constant 3 : i32
    %cst_70 = arith.constant dense<0.000000e+00> : vector<8x128xf32>
    %244 = tpu.matmul %219, %4, %cst_70 {dimension_numbers = #tpu.dot_dimension_numbers<[1], [0], [0], [1], [0, 0, 1, 1], [], []>} : vector<8x32xf32>, vector<32x128xf32>, vector<8x128xf32> -> vector<8x128xf32>
    %245 = arith.mulf %3, %244 : vector<8x128xf32>
    %246 = arith.index_cast %c3_i32 : i32 to index
    %c0_71 = arith.constant 0 : index
    %c0_72 = arith.constant 0 : index
    %247 = vector.load %arg2[%246, %c0_71, %c0_72] : memref<4x8x128xf32, #tpu.memory_space<vmem>>, vector<1x8x128xf32>
    %248 = vector.shape_cast %247 : vector<1x8x128xf32> to vector<8x128xf32>
    %249 = arith.addf %245, %248 : vector<8x128xf32>
    %250 = vector.extract_strided_slice %249 {offsets = [0, 0], sizes = [8, 32], strides = [1, 1]} : vector<8x128xf32> to vector<8x32xf32>
    %251 = arith.negf %250 : vector<8x32xf32>
    %252 = math.exp %251 : vector<8x32xf32>
    %cst_73 = arith.constant 1.000000e+00 : f32
    %253 = vector.broadcast %cst_73 : f32 to vector<8x32xf32>
    %254 = arith.addf %253, %252 : vector<8x32xf32>
    %255 = arith.divf %253, %254 : vector<8x32xf32>
    %256 = vector.extract_strided_slice %249 {offsets = [0, 32], sizes = [8, 32], strides = [1, 1]} : vector<8x128xf32> to vector<8x32xf32>
    %257 = arith.negf %256 : vector<8x32xf32>
    %258 = math.exp %257 : vector<8x32xf32>
    %cst_74 = arith.constant 1.000000e+00 : f32
    %259 = vector.broadcast %cst_74 : f32 to vector<8x32xf32>
    %260 = arith.addf %259, %258 : vector<8x32xf32>
    %261 = arith.divf %259, %260 : vector<8x32xf32>
    %262 = vector.extract_strided_slice %249 {offsets = [0, 64], sizes = [8, 32], strides = [1, 1]} : vector<8x128xf32> to vector<8x32xf32>
    %263 = math.tanh %262 : vector<8x32xf32>
    %264 = vector.extract_strided_slice %249 {offsets = [0, 96], sizes = [8, 32], strides = [1, 1]} : vector<8x128xf32> to vector<8x32xf32>
    %265 = arith.negf %264 : vector<8x32xf32>
    %266 = math.exp %265 : vector<8x32xf32>
    %cst_75 = arith.constant 1.000000e+00 : f32
    %267 = vector.broadcast %cst_75 : f32 to vector<8x32xf32>
    %268 = arith.addf %267, %266 : vector<8x32xf32>
    %269 = arith.divf %267, %268 : vector<8x32xf32>
    %270 = arith.mulf %261, %239 : vector<8x32xf32>
    %271 = arith.mulf %255, %263 : vector<8x32xf32>
    %272 = arith.addf %270, %271 : vector<8x32xf32>
    %273 = math.tanh %272 : vector<8x32xf32>
    %274 = arith.mulf %269, %273 : vector<8x32xf32>
    %cst_76 = arith.constant dense<0.000000e+00> : vector<8xf32>
    %275 = vector.multi_reduction <add>, %274, %cst_76 [1] : vector<8x32xf32> to vector<8xf32>
    %276 = vector.shape_cast %275 : vector<8xf32> to vector<8x1xf32>
    %cst_77 = arith.constant 3.200000e+01 : f32
    %277 = vector.broadcast %cst_77 : f32 to vector<8x1xf32>
    %278 = arith.divf %276, %277 : vector<8x1xf32>
    %279 = vector.broadcast %278 : vector<8x1xf32> to vector<8x32xf32>
    %280 = arith.subf %274, %279 : vector<8x32xf32>
    %281 = arith.mulf %280, %280 : vector<8x32xf32>
    %cst_78 = arith.constant dense<0.000000e+00> : vector<8xf32>
    %282 = vector.multi_reduction <add>, %281, %cst_78 [1] : vector<8x32xf32> to vector<8xf32>
    %283 = vector.shape_cast %282 : vector<8xf32> to vector<8x1xf32>
    %cst_79 = arith.constant 3.200000e+01 : f32
    %284 = vector.broadcast %cst_79 : f32 to vector<8x1xf32>
    %285 = arith.divf %283, %284 : vector<8x1xf32>
    %286 = vector.broadcast %278 : vector<8x1xf32> to vector<8x32xf32>
    %287 = arith.subf %274, %286 : vector<8x32xf32>
    %cst_80 = arith.constant 9.99999974E-6 : f32
    %288 = vector.broadcast %cst_80 : f32 to vector<8x1xf32>
    %289 = arith.addf %285, %288 : vector<8x1xf32>
    %290 = math.rsqrt %289 : vector<8x1xf32>
    %291 = vector.broadcast %290 : vector<8x1xf32> to vector<8x32xf32>
    %292 = arith.mulf %287, %291 : vector<8x32xf32>
    %293 = arith.mulf %292, %7 : vector<8x32xf32>
    %294 = arith.addf %293, %10 : vector<8x32xf32>
    %cst_81 = arith.constant dense<0.000000e+00> : vector<8xf32>
    %295 = vector.multi_reduction <add>, %272, %cst_81 [1] : vector<8x32xf32> to vector<8xf32>
    %296 = vector.shape_cast %295 : vector<8xf32> to vector<8x1xf32>
    %cst_82 = arith.constant 3.200000e+01 : f32
    %297 = vector.broadcast %cst_82 : f32 to vector<8x1xf32>
    %298 = arith.divf %296, %297 : vector<8x1xf32>
    %299 = vector.broadcast %298 : vector<8x1xf32> to vector<8x32xf32>
    %300 = arith.subf %272, %299 : vector<8x32xf32>
    %301 = arith.mulf %300, %300 : vector<8x32xf32>
    %cst_83 = arith.constant dense<0.000000e+00> : vector<8xf32>
    %302 = vector.multi_reduction <add>, %301, %cst_83 [1] : vector<8x32xf32> to vector<8xf32>
    %303 = vector.shape_cast %302 : vector<8xf32> to vector<8x1xf32>
    %cst_84 = arith.constant 3.200000e+01 : f32
    %304 = vector.broadcast %cst_84 : f32 to vector<8x1xf32>
    %305 = arith.divf %303, %304 : vector<8x1xf32>
    %306 = vector.broadcast %298 : vector<8x1xf32> to vector<8x32xf32>
    %307 = arith.subf %272, %306 : vector<8x32xf32>
    %cst_85 = arith.constant 9.99999974E-6 : f32
    %308 = vector.broadcast %cst_85 : f32 to vector<8x1xf32>
    %309 = arith.addf %305, %308 : vector<8x1xf32>
    %310 = math.rsqrt %309 : vector<8x1xf32>
    %311 = vector.broadcast %310 : vector<8x1xf32> to vector<8x32xf32>
    %312 = arith.mulf %307, %311 : vector<8x32xf32>
    %313 = arith.mulf %312, %13 : vector<8x32xf32>
    %314 = arith.addf %313, %16 : vector<8x32xf32>
    %315 = arith.index_cast %c3_i32 : i32 to index
    %c0_86 = arith.constant 0 : index
    %c0_87 = arith.constant 0 : index
    %316 = vector.load %arg11[%315, %c0_86, %c0_87] : memref<4x8x32xf32, #tpu.memory_space<vmem>>, vector<1x8x32xf32>
    %317 = vector.shape_cast %316 : vector<1x8x32xf32> to vector<8x32xf32>
    %318 = vector.shape_cast %294 : vector<8x32xf32> to vector<1x8x32xf32>
    tpu.vector_store %arg11[%315, %c0_86, %c0_87], %318 {strides = array<i32>} : memref<4x8x32xf32, #tpu.memory_space<vmem>>, vector<1x8x32xf32>,
    %c4_i32 = arith.constant 4 : i32
    %c0_88 = arith.constant 0 : index
    %c0_89 = arith.constant 0 : index
    %319 = vector.load %arg12[%c0_88, %c0_89] : memref<8x32xf32, #tpu.memory_space<vmem>>, vector<8x32xf32>
    tpu.vector_store %arg12[%c0_88, %c0_89], %294 {strides = array<i32>} : memref<8x32xf32, #tpu.memory_space<vmem>>, vector<8x32xf32>,
    %c0_90 = arith.constant 0 : index
    %c0_91 = arith.constant 0 : index
    %320 = vector.load %arg13[%c0_90, %c0_91] : memref<8x32xf32, #tpu.memory_space<vmem>>, vector<8x32xf32>
    tpu.vector_store %arg13[%c0_90, %c0_91], %314 {strides = array<i32>} : memref<8x32xf32, #tpu.memory_space<vmem>>, vector<8x32xf32>,
    return
  }
  func.func @transform_0(%arg0: i32, %arg1: i32) -> (i32, i32, i32) {
    %c0_i32 = arith.constant 0 : i32
    %c0_i32_0 = arith.constant 0 : i32
    return %arg1, %arg0, %c0_i32 : i32, i32, i32
  }
  func.func @transform_1(%arg0: i32, %arg1: i32) -> (i32, i32) {
    %c0_i32 = arith.constant 0 : i32
    %c0_i32_0 = arith.constant 0 : i32
    return %arg0, %c0_i32 : i32, i32
  }
  func.func @transform_2(%arg0: i32, %arg1: i32) -> (i32, i32) {
    %c0_i32 = arith.constant 0 : i32
    %c0_i32_0 = arith.constant 0 : i32
    return %arg0, %c0_i32 : i32, i32
  }
  func.func @transform_3(%arg0: i32, %arg1: i32) -> (i32, i32) {
    %c0_i32 = arith.constant 0 : i32
    %c0_i32_0 = arith.constant 0 : i32
    return %arg0, %c0_i32 : i32, i32
  }
  func.func @transform_4(%arg0: i32, %arg1: i32) -> (i32, i32) {
    %c0_i32 = arith.constant 0 : i32
    %c0_i32_0 = arith.constant 0 : i32
    %c0_i32_1 = arith.constant 0 : i32
    return %c0_i32, %c0_i32_0 : i32, i32
  }
  func.func @transform_5(%arg0: i32, %arg1: i32) -> (i32, i32) {
    %c0_i32 = arith.constant 0 : i32
    %c0_i32_0 = arith.constant 0 : i32
    %c0_i32_1 = arith.constant 0 : i32
    return %c0_i32, %c0_i32_0 : i32, i32
  }
  func.func @transform_6(%arg0: i32, %arg1: i32) -> (i32, i32) {
    %c0_i32 = arith.constant 0 : i32
    %c0_i32_0 = arith.constant 0 : i32
    %c0_i32_1 = arith.constant 0 : i32
    return %c0_i32, %c0_i32_0 : i32, i32
  }
  func.func @transform_7(%arg0: i32, %arg1: i32) -> (i32, i32) {
    %c0_i32 = arith.constant 0 : i32
    %c0_i32_0 = arith.constant 0 : i32
    %c0_i32_1 = arith.constant 0 : i32
    return %c0_i32, %c0_i32_0 : i32, i32
  }
  func.func @transform_8(%arg0: i32, %arg1: i32) -> (i32, i32) {
    %c0_i32 = arith.constant 0 : i32
    %c0_i32_0 = arith.constant 0 : i32
    %c0_i32_1 = arith.constant 0 : i32
    return %c0_i32, %c0_i32_0 : i32, i32
  }
  func.func @transform_9(%arg0: i32, %arg1: i32) -> (i32, i32, i32) {
    %c0_i32 = arith.constant 0 : i32
    %c0_i32_0 = arith.constant 0 : i32
    return %arg1, %arg0, %c0_i32 : i32, i32, i32
  }
}

</mosaic_0001>

<llo_original>
// kernel: inference_rnn_lstm.1
$region0: #{inference_rnn_lstm.1}
  #allocation0 [shape = 'u32[]', space=smem, size = 0x4, offset = 0x4, fixed_abs, tag = 'smem constant byte address 0x4 - core index']
  #allocation1 [shape = 'u32[144,128]{1,0:T(1,128)}', space=vmem, size = 0x12000, scoped, tag = 'internal scratch']
  #allocation2 [shape = 'f32[8,32]{1,0:T(8,128)}', space=vmem, size = 0x1000, scoped, tag = 'scratch operand']
  #allocation3 [shape = 'f32[8,32]{1,0:T(8,128)}', space=vmem, size = 0x1000, scoped, tag = 'scratch operand']
  %s0 = inlined_call_operand.vmem [shape: f32[8,8,128], index: 0, kind: input, shape index: {}]
  %s1 = inlined_call_operand.vmem [shape: f32[8,128], index: 1, kind: input, shape index: {}]
  %s2 = inlined_call_operand.vmem [shape: f32[8,32], index: 2, kind: input, shape index: {}]
  %s3 = inlined_call_operand.vmem [shape: f32[8,32], index: 3, kind: input, shape index: {}]
  %s4 = inlined_call_operand.vmem [shape: f32[32,128], index: 4, kind: input, shape index: {}]
  %s5 = inlined_call_operand.vmem [shape: f32[1,32], index: 5, kind: input, shape index: {}]
  %s6 = inlined_call_operand.vmem [shape: f32[1,32], index: 6, kind: input, shape index: {}]
  %s7 = inlined_call_operand.vmem [shape: f32[1,32], index: 7, kind: input, shape index: {}]
  %s8 = inlined_call_operand.vmem [shape: f32[1,32], index: 8, kind: input, shape index: {}]
  %s9 = inlined_call_operand.vmem [shape: f32[8,8,32], index: 9, kind: output, shape index: {}]
  %s10 = sld [smem:[#allocation0]]
  $region73: #{inference_rnn_lstm.1} parent=0
    _
  %s12 = ssub.s32 1, %s10
  %s13 = scalar_select 0, %s12, %s10
  loop: start=0, step=1, limit=4
  $region2: #{inference_rnn_lstm.1} parent=0 // loop_pre_header
    _
  $region3: #{inference_rnn_lstm.1} parent=0 // loop_header
    %s15 = sphi 0, %s19
    %p16 = scmp.ge.s32.totalorder %s15, 4
    %s22 = sphi 0, %s34
    %s23 = sphi 0, %s30
    %s24 = sphi 0, %s22
    %s25 = sphi 0, %s23
    %s26 = sphi 0, %s24
    %s27 = sphi 0, %s25
    %s39 = sphi 0, %s41
    %s42 = sphi 0, %s39
    %s43 = sphi 0, %s42
    %s59 = sphi 0, %s43
    %s65 = sphi 0, %s67
    %s68 = sphi 0, %s65
    %s69 = sphi 0, %s68
    %s85 = sphi 0, %s69
    %s91 = sphi 0, %s93
    %s94 = sphi 0, %s91
    %s95 = sphi 0, %s94
    %s111 = sphi 0, %s95
    %s117 = sphi 0, %s119
    %s120 = sphi 0, %s117
    %s121 = sphi 0, %s120
    %s137 = sphi 0, %s121
    %s141 = sphi 0, %s141
    %s143 = sphi 0, %s141
    %s144 = sphi 0, %s143
    %s158 = sphi 0, %s144
    %s162 = sphi 0, %s162
    %s164 = sphi 0, %s162
    %s165 = sphi 0, %s164
    %s179 = sphi 0, %s165
    %s183 = sphi 0, %s183
    %s185 = sphi 0, %s183
    %s186 = sphi 0, %s185
    %s200 = sphi 0, %s186
    %s204 = sphi 0, %s204
    %s206 = sphi 0, %s204
    %s207 = sphi 0, %s206
    %s221 = sphi 0, %s207
    %s225 = sphi 0, %s225
    %s227 = sphi 0, %s225
    %s228 = sphi 0, %s227
    %s242 = sphi 0, %s228
    %s250 = sphi 0, %s252
    %s253 = sphi 0, %s250
    %s254 = sphi 0, %s253
    %s270 = sphi 0, %s254
  $region4: #{inference_rnn_lstm.1} parent=0 // loop_header_branch
    %18 = sbr.rel (%p16) target = $region8
  $region5: #{inference_rnn_lstm.1} parent=0 // loop_body
    %s20 = ssub.s32 %s15, 1
    %s21 = ssub.s32 %s15, 2
    %s28 = sadd.s32 1, %s23
    %p29 = scmp.ge.s32.totalorder %s28, 2
    %s30 = scalar_select %p29, 0, %s28
    %s31 = sadd.s32 1, %s22
    %s32 = scalar_select %p29, %s31, %s22
    %p33 = scmp.ge.s32.totalorder %s32, 1
    %s34 = scalar_select %p33, 0, %s32
    %s35 = ssub.s32 %s23, %s30
    %s36 = ssub.s32 %s22, %s34
    %s37 = sor.u32 %s35, %s36
    %p38 = scmp.eq.s32.totalorder %s37, 0
    %s40 = sadd.s32 %s39, 1
    %s41 = scalar_select %p38, %s39, %s40
    %p44 = pneg %p38
    %p45 = scmp.eq.s32.totalorder %s15, 1
    %p46 = por %p44, %p45
    %p47 = scmp.ne.s32.totalorder %s39, %s42
    %p48 = scmp.eq.s32.totalorder %s15, 0
    %p49 = por %p47, %p48
    %p50 = scmp.ne.s32.totalorder %s39, %s42
    %p51 = scmp.eq.s32.totalorder %s20, 1
    %p52 = por %p50, %p51
    %p53 = scmp.ne.s32.totalorder %s42, %s43
    %p54 = scmp.eq.s32.totalorder %s20, 0
    %p55 = por %p53, %p54
    %p56 = scmp.ne.s32.totalorder %s42, %s43
    %p57 = scmp.eq.s32.totalorder %s21, 1
    %p58 = por %p56, %p57
    %p60 = scmp.ne.s32.totalorder %s43, %s59
    %p61 = scmp.eq.s32.totalorder %s21, 0
    %p62 = por %p60, %p61
    %s63 = ssub.s32 %s22, %s34
    %p64 = scmp.eq.s32.totalorder %s63, 0
    %s66 = sadd.s32 %s65, 1
    %s67 = scalar_select %p64, %s65, %s66
    %p70 = pneg %p64
    %p71 = scmp.eq.s32.totalorder %s15, 1
    %p72 = por %p70, %p71
    %p73 = scmp.ne.s32.totalorder %s65, %s68
    %p74 = scmp.eq.s32.totalorder %s15, 0
    %p75 = por %p73, %p74
    %p76 = scmp.ne.s32.totalorder %s65, %s68
    %p77 = scmp.eq.s32.totalorder %s20, 1
    %p78 = por %p76, %p77
    %p79 = scmp.ne.s32.totalorder %s68, %s69
    %p80 = scmp.eq.s32.totalorder %s20, 0
    %p81 = por %p79, %p80
    %p82 = scmp.ne.s32.totalorder %s68, %s69
    %p83 = scmp.eq.s32.totalorder %s21, 1
    %p84 = por %p82, %p83
    %p86 = scmp.ne.s32.totalorder %s69, %s85
    %p87 = scmp.eq.s32.totalorder %s21, 0
    %p88 = por %p86, %p87
    %s89 = ssub.s32 %s22, %s34
    %p90 = scmp.eq.s32.totalorder %s89, 0
    %s92 = sadd.s32 %s91, 1
    %s93 = scalar_select %p90, %s91, %s92
    %p96 = pneg %p90
    %p97 = scmp.eq.s32.totalorder %s15, 1
    %p98 = por %p96, %p97
    %p99 = scmp.ne.s32.totalorder %s91, %s94
    %p100 = scmp.eq.s32.totalorder %s15, 0
    %p101 = por %p99, %p100
    %p102 = scmp.ne.s32.totalorder %s91, %s94
    %p103 = scmp.eq.s32.totalorder %s20, 1
    %p104 = por %p102, %p103
    %p105 = scmp.ne.s32.totalorder %s94, %s95
    %p106 = scmp.eq.s32.totalorder %s20, 0
    %p107 = por %p105, %p106
    %p108 = scmp.ne.s32.totalorder %s94, %s95
    %p109 = scmp.eq.s32.totalorder %s21, 1
    %p110 = por %p108, %p109
    %p112 = scmp.ne.s32.totalorder %s95, %s111
    %p113 = scmp.eq.s32.totalorder %s21, 0
    %p114 = por %p112, %p113
    %s115 = ssub.s32 %s22, %s34
    %p116 = scmp.eq.s32.totalorder %s115, 0
    %s118 = sadd.s32 %s117, 1
    %s119 = scalar_select %p116, %s117, %s118
    %p122 = pneg %p116
    %p123 = scmp.eq.s32.totalorder %s15, 1
    %p124 = por %p122, %p123
    %p125 = scmp.ne.s32.totalorder %s117, %s120
    %p126 = scmp.eq.s32.totalorder %s15, 0
    %p127 = por %p125, %p126
    %p128 = scmp.ne.s32.totalorder %s117, %s120
    %p129 = scmp.eq.s32.totalorder %s20, 1
    %p130 = por %p128, %p129
    %p131 = scmp.ne.s32.totalorder %s120, %s121
    %p132 = scmp.eq.s32.totalorder %s20, 0
    %p133 = por %p131, %p132
    %p134 = scmp.ne.s32.totalorder %s120, %s121
    %p135 = scmp.eq.s32.totalorder %s21, 1
    %p136 = por %p134, %p135
    %p138 = scmp.ne.s32.totalorder %s121, %s137
    %p139 = scmp.eq.s32.totalorder %s21, 0
    %p140 = por %p138, %p139
    %s142 = sadd.s32 %s141, 1
    %p145 = scmp.eq.s32.totalorder %s15, 1
    %p146 = scmp.ne.s32.totalorder %s141, %s143
    %p147 = scmp.eq.s32.totalorder %s15, 0
    %p148 = por %p146, %p147
    %p149 = scmp.ne.s32.totalorder %s141, %s143
    %p150 = scmp.eq.s32.totalorder %s20, 1
    %p151 = por %p149, %p150
    %p152 = scmp.ne.s32.totalorder %s143, %s144
    %p153 = scmp.eq.s32.totalorder %s20, 0
    %p154 = por %p152, %p153
    %p155 = scmp.ne.s32.totalorder %s143, %s144
    %p156 = scmp.eq.s32.totalorder %s21, 1
    %p157 = por %p155, %p156
    %p159 = scmp.ne.s32.totalorder %s144, %s158
    %p160 = scmp.eq.s32.totalorder %s21, 0
    %p161 = por %p159, %p160
    %s163 = sadd.s32 %s162, 1
    %p166 = scmp.eq.s32.totalorder %s15, 1
    %p167 = scmp.ne.s32.totalorder %s162, %s164
    %p168 = scmp.eq.s32.totalorder %s15, 0
    %p169 = por %p167, %p168
    %p170 = scmp.ne.s32.totalorder %s162, %s164
    %p171 = scmp.eq.s32.totalorder %s20, 1
    %p172 = por %p170, %p171
    %p173 = scmp.ne.s32.totalorder %s164, %s165
    %p174 = scmp.eq.s32.totalorder %s20, 0
    %p175 = por %p173, %p174
    %p176 = scmp.ne.s32.totalorder %s164, %s165
    %p177 = scmp.eq.s32.totalorder %s21, 1
    %p178 = por %p176, %p177
    %p180 = scmp.ne.s32.totalorder %s165, %s179
    %p181 = scmp.eq.s32.totalorder %s21, 0
    %p182 = por %p180, %p181
    %s184 = sadd.s32 %s183, 1
    %p187 = scmp.eq.s32.totalorder %s15, 1
    %p188 = scmp.ne.s32.totalorder %s183, %s185
    %p189 = scmp.eq.s32.totalorder %s15, 0
    %p190 = por %p188, %p189
    %p191 = scmp.ne.s32.totalorder %s183, %s185
    %p192 = scmp.eq.s32.totalorder %s20, 1
    %p193 = por %p191, %p192
    %p194 = scmp.ne.s32.totalorder %s185, %s186
    %p195 = scmp.eq.s32.totalorder %s20, 0
    %p196 = por %p194, %p195
    %p197 = scmp.ne.s32.totalorder %s185, %s186
    %p198 = scmp.eq.s32.totalorder %s21, 1
    %p199 = por %p197, %p198
    %p201 = scmp.ne.s32.totalorder %s186, %s200
    %p202 = scmp.eq.s32.totalorder %s21, 0
    %p203 = por %p201, %p202
    %s205 = sadd.s32 %s204, 1
    %p208 = scmp.eq.s32.totalorder %s15, 1
    %p209 = scmp.ne.s32.totalorder %s204, %s206
    %p210 = scmp.eq.s32.totalorder %s15, 0
    %p211 = por %p209, %p210
    %p212 = scmp.ne.s32.totalorder %s204, %s206
    %p213 = scmp.eq.s32.totalorder %s20, 1
    %p214 = por %p212, %p213
    %p215 = scmp.ne.s32.totalorder %s206, %s207
    %p216 = scmp.eq.s32.totalorder %s20, 0
    %p217 = por %p215, %p216
    %p218 = scmp.ne.s32.totalorder %s206, %s207
    %p219 = scmp.eq.s32.totalorder %s21, 1
    %p220 = por %p218, %p219
    %p222 = scmp.ne.s32.totalorder %s207, %s221
    %p223 = scmp.eq.s32.totalorder %s21, 0
    %p224 = por %p222, %p223
    %s226 = sadd.s32 %s225, 1
    %p229 = scmp.eq.s32.totalorder %s15, 1
    %p230 = scmp.ne.s32.totalorder %s225, %s227
    %p231 = scmp.eq.s32.totalorder %s15, 0
    %p232 = por %p230, %p231
    %p233 = scmp.ne.s32.totalorder %s225, %s227
    %p234 = scmp.eq.s32.totalorder %s20, 1
    %p235 = por %p233, %p234
    %p236 = scmp.ne.s32.totalorder %s227, %s228
    %p237 = scmp.eq.s32.totalorder %s20, 0
    %p238 = por %p236, %p237
    %p239 = scmp.ne.s32.totalorder %s227, %s228
    %p240 = scmp.eq.s32.totalorder %s21, 1
    %p241 = por %p239, %p240
    %p243 = scmp.ne.s32.totalorder %s228, %s242
    %p244 = scmp.eq.s32.totalorder %s21, 0
    %p245 = por %p243, %p244
    %s246 = ssub.s32 %s23, %s30
    %s247 = ssub.s32 %s22, %s34
    %s248 = sor.u32 %s246, %s247
    %p249 = scmp.eq.s32.totalorder %s248, 0
    %s251 = sadd.s32 %s250, 1
    %s252 = scalar_select %p249, %s250, %s251
    %p255 = pneg %p249
    %p256 = scmp.eq.s32.totalorder %s15, 1
    %p257 = por %p255, %p256
    %p258 = scmp.ne.s32.totalorder %s250, %s253
    %p259 = scmp.eq.s32.totalorder %s15, 0
    %p260 = por %p258, %p259
    %p261 = scmp.ne.s32.totalorder %s250, %s253
    %p262 = scmp.eq.s32.totalorder %s20, 1
    %p263 = por %p261, %p262
    %p264 = scmp.ne.s32.totalorder %s253, %s254
    %p265 = scmp.eq.s32.totalorder %s20, 0
    %p266 = por %p264, %p265
    %p267 = scmp.ne.s32.totalorder %s253, %s254
    %p268 = scmp.eq.s32.totalorder %s21, 1
    %p269 = por %p267, %p268
    %p271 = scmp.ne.s32.totalorder %s254, %s270
    %p272 = scmp.eq.s32.totalorder %s21, 0
    %p273 = por %p271, %p272
    %p274 = scmp.le.s32.totalorder 1, %s15
    %p275 = scmp.lt.s32.totalorder %s15, 3
    %p276 = pnand %p274, %p275
    %p277 = pneg %p276
    // Predicated region
    $region9: #{inference_rnn_lstm.1} parent=5 // pred_check
      _
    $region10: #{inference_rnn_lstm.1} parent=5 // pred_check_branch
      %279 = sbr.rel (%p276) target = $region12
    $region11: #{inference_rnn_lstm.1} parent=5 // pred_region
      %s280 = ssub.s32 %s15, 1
      // Predicated region
      $region13: #{inference_rnn_lstm.1} parent=11 // pred_check
        %p281 = pneg %p81
      $region14: #{inference_rnn_lstm.1} parent=11 // pred_check_branch
        %283 = sbr.rel (%p281) target = $region16
      $region15: #{inference_rnn_lstm.1} parent=11 // pred_region
        %p284 = scmp.lt.s32.totalorder %s24, 0
        %s285 = scalar_select %p284, %s24, 0
        %s286 = smul.addr %s285, 8
        %s287 = scalar_lea.vmem %s1, %s286
      $region16: #{inference_rnn_lstm.1} parent=11 // pred_fallthru
        _
      // Predicated region
      $region17: #{inference_rnn_lstm.1} parent=11 // pred_check
        %p288 = pneg %p107
      $region18: #{inference_rnn_lstm.1} parent=11 // pred_check_branch
        %290 = sbr.rel (%p288) target = $region20
      $region19: #{inference_rnn_lstm.1} parent=11 // pred_region
        %p291 = scmp.lt.s32.totalorder %s24, 0
        %s292 = scalar_select %p291, %s24, 0
        %s293 = smul.addr %s292, 8
        %s294 = scalar_lea.vmem %s2, %s293
      $region20: #{inference_rnn_lstm.1} parent=11 // pred_fallthru
        _
      // Predicated region
      $region21: #{inference_rnn_lstm.1} parent=11 // pred_check
        %p295 = pneg %p133
      $region22: #{inference_rnn_lstm.1} parent=11 // pred_check_branch
        %297 = sbr.rel (%p295) target = $region24
      $region23: #{inference_rnn_lstm.1} parent=11 // pred_region
        %p298 = scmp.lt.s32.totalorder %s24, 0
        %s299 = scalar_select %p298, %s24, 0
        %s300 = smul.addr %s299, 8
        %s301 = scalar_lea.vmem %s3, %s300
      $region24: #{inference_rnn_lstm.1} parent=11 // pred_fallthru
        _
      // Predicated region
      $region25: #{inference_rnn_lstm.1} parent=11 // pred_check
        %p302 = pneg %p154
      $region26: #{inference_rnn_lstm.1} parent=11 // pred_check_branch
        %304 = sbr.rel (%p302) target = $region28
      $region27: #{inference_rnn_lstm.1} parent=11 // pred_region
        _
      $region28: #{inference_rnn_lstm.1} parent=11 // pred_fallthru
        _
      // Predicated region
      $region29: #{inference_rnn_lstm.1} parent=11 // pred_check
        %p305 = pneg %p175
      $region30: #{inference_rnn_lstm.1} parent=11 // pred_check_branch
        %307 = sbr.rel (%p305) target = $region32
      $region31: #{inference_rnn_lstm.1} parent=11 // pred_region
        _
      $region32: #{inference_rnn_lstm.1} parent=11 // pred_fallthru
        _
      // Predicated region
      $region33: #{inference_rnn_lstm.1} parent=11 // pred_check
        %p308 = pneg %p196
      $region34: #{inference_rnn_lstm.1} parent=11 // pred_check_branch
        %310 = sbr.rel (%p308) target = $region36
      $region35: #{inference_rnn_lstm.1} parent=11 // pred_region
        _
      $region36: #{inference_rnn_lstm.1} parent=11 // pred_fallthru
        _
      // Predicated region
      $region37: #{inference_rnn_lstm.1} parent=11 // pred_check
        %p311 = pneg %p217
      $region38: #{inference_rnn_lstm.1} parent=11 // pred_check_branch
        %313 = sbr.rel (%p311) target = $region40
      $region39: #{inference_rnn_lstm.1} parent=11 // pred_region
        _
      $region40: #{inference_rnn_lstm.1} parent=11 // pred_fallthru
        _
      // Predicated region
      $region41: #{inference_rnn_lstm.1} parent=11 // pred_check
        %p314 = pneg %p238
      $region42: #{inference_rnn_lstm.1} parent=11 // pred_check_branch
        %316 = sbr.rel (%p314) target = $region44
      $region43: #{inference_rnn_lstm.1} parent=11 // pred_region
        _
      $region44: #{inference_rnn_lstm.1} parent=11 // pred_fallthru
        _
    $region12: #{inference_rnn_lstm.1} parent=5 // pred_fallthru
      _
    %p317 = scmp.lt.s32.totalorder %s15, 2
    // Predicated region
    $region45: #{inference_rnn_lstm.1} parent=5 // pred_check
      %p318 = pneg %p317
    $region46: #{inference_rnn_lstm.1} parent=5 // pred_check_branch
      %320 = sbr.rel (%p318) target = $region48
    $region47: #{inference_rnn_lstm.1} parent=5 // pred_region
      // Predicated region
      $region49: #{inference_rnn_lstm.1} parent=47 // pred_check
        %p321 = pneg %p49
      $region50: #{inference_rnn_lstm.1} parent=47 // pred_check_branch
        %323 = sbr.rel (%p321) target = $region52
      $region51: #{inference_rnn_lstm.1} parent=47 // pred_region
        %s324 = smul.u32 4, %s23
        %p325 = scmp.lt.s32.totalorder %s324, 7
        %s326 = scalar_select %p325, %s324, 7
        %p327 = scmp.lt.s32.totalorder %s22, 0
        %s328 = scalar_select %p327, %s22, 0
        %s329 = sadd.s32 %s328, %s326
        %s330 = smul.addr %s329, 8
        %s331 = scalar_lea.vmem %s0, %s330
        %s332 = smul.u32 4, %s23
      $region52: #{inference_rnn_lstm.1} parent=47 // pred_fallthru
        _
    $region48: #{inference_rnn_lstm.1} parent=5 // pred_fallthru
      _
    %p333 = scmp.le.s32.totalorder 1, %s15
    %p334 = scmp.lt.s32.totalorder %s15, 3
    %p335 = pnand %p333, %p334
    %p336 = pneg %p335
    // Predicated region
    $region53: #{inference_rnn_lstm.1} parent=5 // pred_check
      _
    $region54: #{inference_rnn_lstm.1} parent=5 // pred_check_branch
      %338 = sbr.rel (%p335) target = $region56
    $region55: #{inference_rnn_lstm.1} parent=5 // pred_region
      %s339 = ssub.s32 %s15, 1
      %s340 = smul.u32 4, %s25
      %p341 = scmp.lt.s32.totalorder %s340, 7
      %s342 = scalar_select %p341, %s340, 7
      %p343 = scmp.lt.s32.totalorder %s24, 0
      %s344 = scalar_select %p343, %s24, 0
      %s345 = sadd.s32 %s344, %s342
      %s346 = smul.addr %s345, 8
      %s347 = scalar_lea.vmem %s0, %s346
      %p348 = pneg %p55
      %p349 = pneg %p52
      %p350 = scmp.lt.s32.totalorder %s24, 0
      %s351 = scalar_select %p350, %s24, 0
      %s352 = smul.addr %s351, 8
      %s353 = scalar_lea.vmem %s1, %s352
      %p354 = pneg %p81
      %p355 = pneg %p78
      %p356 = scmp.lt.s32.totalorder %s24, 0
      %s357 = scalar_select %p356, %s24, 0
      %s358 = smul.addr %s357, 8
      %s359 = scalar_lea.vmem %s2, %s358
      %p360 = pneg %p107
      %p361 = pneg %p104
      %p362 = scmp.lt.s32.totalorder %s24, 0
      %s363 = scalar_select %p362, %s24, 0
      %s364 = smul.addr %s363, 8
      %s365 = scalar_lea.vmem %s3, %s364
      %p366 = pneg %p133
      %p367 = pneg %p130
      %p368 = pneg %p154
      %p369 = pneg %p151
      %p370 = pneg %p175
      %p371 = pneg %p172
      %p372 = pneg %p196
      %p373 = pneg %p193
      %p374 = pneg %p217
      %p375 = pneg %p214
      %p376 = pneg %p238
      %p377 = pneg %p235
      %p378 = pneg %p266
      %p379 = pneg %p263
      %s380 = smul.u32 4, %s25
      %p381 = scmp.lt.s32.totalorder %s380, 7
      %s382 = scalar_select %p381, %s380, 7
      %p383 = scmp.lt.s32.totalorder %s24, 0
      %s384 = scalar_select %p383, %s24, 0
      %s385 = sadd.s32 %s384, %s382
      %s386 = smul.addr %s385, 8
      %s387 = scalar_lea.vmem %s9, %s386
      %s388 = smul.u32 4, %s25
      %p389 = scmp.lt.s32.totalorder %s388, 7
      %s390 = scalar_select %p389, %s388, 7
      %p391 = scmp.lt.s32.totalorder %s24, 0
      %s392 = scalar_select %p391, %s24, 0
      %s393 = sadd.s32 %s392, %s390
      %s394 = smul.addr %s393, 8
      %s395 = scalar_lea.vmem %s0, %s394
      %s396 = smul.u32 4, %s25
      %p397 = scmp.lt.s32.totalorder %s24, 0
      %s398 = scalar_select %p397, %s24, 0
      %s399 = smul.addr %s398, 8
      %s400 = scalar_lea.vmem %s1, %s399
      %p401 = scmp.lt.s32.totalorder %s24, 0
      %s402 = scalar_select %p401, %s24, 0
      %s403 = smul.addr %s402, 8
      %s404 = scalar_lea.vmem %s2, %s403
      %p405 = scmp.lt.s32.totalorder %s24, 0
      %s406 = scalar_select %p405, %s24, 0
      %s407 = smul.addr %s406, 8
      %s408 = scalar_lea.vmem %s3, %s407
      %s409 = smul.u32 4, %s25
      %p410 = scmp.lt.s32.totalorder %s409, 7
      %s411 = scalar_select %p410, %s409, 7
      %p412 = scmp.lt.s32.totalorder %s24, 0
      %s413 = scalar_select %p412, %s24, 0
      %s414 = sadd.s32 %s413, %s411
      %s415 = smul.addr %s414, 8
      %s416 = scalar_lea.vmem %s9, %s415
      %s417 = smul.u32 4, %s25
      %p418 = scmp.eq.s32.totalorder %s25, 0
      // Predicated region
      $region57: #{inference_rnn_lstm.1} parent=55 // pred_check
        %p419 = pneg %p418
      $region58: #{inference_rnn_lstm.1} parent=55 // pred_check_branch
        %421 = sbr.rel (%p419) target = $region60
      $region59: #{inference_rnn_lstm.1} parent=55 // pred_region
        %v422 = vld [vmem:[%s404] sm:$0xff]
        %vm423 = vcmask 261120
        %424 = vst.msk [vmem:[#allocation2] sm:$0xff] %vm423, %v422
        %v425 = vld [vmem:[%s408] sm:$0xff]
        %426 = vst.msk [vmem:[#allocation3] sm:$0xff] %vm423, %v425
      $region60: #{inference_rnn_lstm.1} parent=55 // pred_fallthru
        _
      %v427 = vld [vmem:[%s400] sm:$0xff]
      %v428 = vld [vmem:[%s4] sm:$0xff]
      %v429 = vld [vmem:[%s4 + $0x8] sm:$0xff]
      %v430 = vld [vmem:[%s4 + $0x10] sm:$0xff]
      %v431 = vld [vmem:[%s4 + $0x18] sm:$0xff]
      %v432 = vld [vmem:[%s5] sm:$0x1]
      %v434 = vlaneseq
      %v435 = vshrl.u32 %v434, 7
      %v436 = vsub.s32 0, %v435
      %v437 = vrot.slane %v432, %v436
      %v438 = vld [vmem:[%s6] sm:$0x1]
      %v440 = vlaneseq
      %v441 = vshrl.u32 %v440, 7
      %v442 = vsub.s32 0, %v441
      %v443 = vrot.slane %v438, %v442
      %v444 = vld [vmem:[%s7] sm:$0x1]
      %v446 = vlaneseq
      %v447 = vshrl.u32 %v446, 7
      %v448 = vsub.s32 0, %v447
      %v449 = vrot.slane %v444, %v448
      %v450 = vld [vmem:[%s8] sm:$0x1]
      %v452 = vlaneseq
      %v453 = vshrl.u32 %v452, 7
      %v454 = vsub.s32 0, %v453
      %v455 = vrot.slane %v450, %v454
      %v456 = vld [vmem:[#allocation2] sm:$0xff]
      %v457 = vld [vmem:[#allocation3] sm:$0xff]
      %vm458 = vcmask 261120
      %v460 = vsel %vm458, %v456, 0
      %462 = vmatprep.subr.mxu0 0.0
      %463 = vmatpush1.msra.mxu0 %v428
      %464 = vmatprep.subr.mxu0 0.0
      %465 = vmatpush1.msra.mxu0 %v429
      %466 = vmatprep.subr.mxu0 0.0
      %467 = vmatpush1.msra.mxu0 %v430
      %468 = vmatprep.subr.mxu0 0.0
      %469 = vmatpush1.msra.mxu0 %v431
      %470 = vmatprep.subr.mxu0 0.0
      %471 = vmatpush1.msra.mxu0 0.0
      %472 = vmatprep.subr.mxu0 0.0
      %473 = vmatpush1.msra.mxu0 0.0
      %474 = vmatprep.subr.mxu0 0.0
      %475 = vmatpush1.msra.mxu0 0.0
      %476 = vmatprep.subr.mxu0 0.0
      %477 = vmatpush1.msra.mxu0 0.0
      %478 = vmatprep.subr.mxu0 0.0
      %479 = vmatpush1.msra.mxu0 0.0
      %480 = vmatprep.subr.mxu0 0.0
      %481 = vmatpush1.msra.mxu0 0.0
      %482 = vmatprep.subr.mxu0 0.0
      %483 = vmatpush1.msra.mxu0 0.0
      %484 = vmatprep.subr.mxu0 0.0
      %485 = vmatpush1.msra.mxu0 0.0
      %486 = vmatprep.subr.mxu0 0.0
      %487 = vmatpush1.msra.mxu0 0.0
      %488 = vmatprep.subr.mxu0 0.0
      %489 = vmatpush1.msra.mxu0 0.0
      %490 = vmatprep.subr.mxu0 0.0
      %491 = vmatpush1.msra.mxu0 0.0
      %492 = vmatprep.subr.mxu0 0.0
      %493 = vmatpush1.msra.mxu0 0.0
      %494 = vmatprep.subr.mxu0 0.0
      %495 = vmatpush1.msra.mxu0 0.0
      %496 = vmatprep.subr.mxu0 0.0
      %497 = vmatpush1.msra.mxu0 0.0
      %498 = vmatprep.subr.mxu0 0.0
      %499 = vmatpush1.msra.mxu0 0.0
      %500 = vmatprep.subr.mxu0 0.0
      %501 = vmatpush1.msra.mxu0 0.0
      %502 = vmatprep.subr.mxu0 0.0
      %503 = vmatpush1.msra.mxu0 0.0
      %504 = vmatprep.subr.mxu0 0.0
      %505 = vmatpush1.msra.mxu0 0.0
      %506 = vmatprep.subr.mxu0 0.0
      %507 = vmatpush1.msra.mxu0 0.0
      %508 = vmatprep.subr.mxu0 0.0
      %509 = vmatpush1.msra.mxu0 0.0
      %510 = vmatprep.subr.mxu0 0.0
      %511 = vmatpush1.msra.mxu0 0.0
      %512 = vmatprep.subr.mxu0 0.0
      %513 = vmatpush1.msra.mxu0 0.0
      %514 = vmatprep.subr.mxu0 0.0
      %515 = vmatpush1.msra.mxu0 0.0
      %516 = vmatprep.subr.mxu0 0.0
      %517 = vmatpush1.msra.mxu0 0.0
      %518 = vmatprep.subr.mxu0 0.0
      %519 = vmatpush1.msra.mxu0 0.0
      %520 = vmatprep.subr.mxu0 0.0
      %521 = vmatpush1.msra.mxu0 0.0
      %522 = vmatprep.subr.mxu0 0.0
      %523 = vmatpush1.msra.mxu0 0.0
      %524 = vmatprep.subr.mxu0 0.0
      %525 = vmatpush1.msra.mxu0 0.0
      %526 = vmatprep.mubr.f32.mxu0 0.0
      %527 = vmatmul.mubr.f32.gmra.mrb[0].mxu0 %v460
      %v528 = vpop.f32.mrb[0].mxu0
      %v529 = vadd.f32 0.0, %v528
      %v530 = vpop.f32.mrb[0].mxu0
      %531 = vdwg.mxu0
      %v532 = vmul.f32 %v427, %v529
      %v533 = vld [vmem:[%s395] sm:$0xff]
      %v534 = vadd.f32 %v532, %v533
      %v535 = vxor.u32 %v534, 2147483648
      %v536 = vmul.f32 %v535, 1.442695
      %v537 = vpow.pop %v536
      %v538 = vadd.f32 %v537, 1.0
      %v539 = vrcp.pop %v538
      %v540 = vmul.f32 1.0, %v539
      %v541 = vtanh.pop %v534
      %543 = vrot.lane.b32.xlu0 %v457, 32
      %v544 = vpop.permute.xlu0 %543
      %v546 = vmul.f32 %v540, %v544
      %548 = vrot.lane.b32.xlu0 %v541, 64
      %v549 = vpop.permute.xlu0 %548
      %v551 = vmul.f32 %v540, %v549
      %553 = vrot.lane.b32.xlu0 %v551, 32
      %v554 = vpop.permute.xlu0 %553
      %v556 = vadd.f32 %v546, %v554
      %v557 = vtanh.pop %v556
      %559 = vrot.lane.b32.xlu0 %v557, 64
      %v560 = vpop.permute.xlu0 %559
      %v562 = vmul.f32 %v540, %v560
      %564 = vrot.lane.b32.xlu0 %v562, 32
      %v565 = vpop.permute.xlu0 %564
      %v567 = vsel %vm458, %v565, 0.0
      %568 = vadd.xlane.f32.xlu0 %v567
      %v569 = vpop.xlane.xlu0 %568
      %v570 = vrcp.pop 32.0
      %v571 = vmul.f32 %v569, %v570
      %v572 = vsub.f32 %v562, %v571
      %v573 = vmul.f32 %v572, %v572
      %575 = vrot.lane.b32.xlu0 %v573, 32
      %v576 = vpop.permute.xlu0 %575
      %v578 = vsel %vm458, %v576, 0.0
      %579 = vadd.xlane.f32.xlu0 %v578
      %v580 = vpop.xlane.xlu0 %579
      %v581 = vmul.f32 %v580, %v570
      %v582 = vadd.f32 %v581, 1e-05
      %v583 = vrsqrt.pop %v582
      %v584 = vmul.f32 %v572, %v583
      %585 = vrot.lane.b32.xlu0 %v437, 96
      %v586 = vpop.permute.xlu0 %585
      %v588 = vmul.f32 %v584, %v586
      %589 = vrot.lane.b32.xlu0 %v443, 96
      %v590 = vpop.permute.xlu0 %589
      %v592 = vadd.f32 %v588, %v590
      %594 = vrot.lane.b32.xlu0 %v556, 96
      %v595 = vpop.permute.xlu0 %594
      %v597 = vsel %vm458, %v595, 0.0
      %598 = vadd.xlane.f32.xlu0 %v597
      %v599 = vpop.xlane.xlu0 %598
      %v600 = vmul.f32 %v599, %v570
      %v601 = vsub.f32 %v556, %v600
      %v602 = vmul.f32 %v601, %v601
      %604 = vrot.lane.b32.xlu0 %v602, 96
      %v605 = vpop.permute.xlu0 %604
      %v607 = vsel %vm458, %v605, 0.0
      %608 = vadd.xlane.f32.xlu0 %v607
      %v609 = vpop.xlane.xlu0 %608
      %v610 = vmul.f32 %v609, %v570
      %v611 = vadd.f32 %v610, 1e-05
      %v612 = vrsqrt.pop %v611
      %v613 = vmul.f32 %v601, %v612
      %614 = vrot.lane.b32.xlu0 %v449, 32
      %v615 = vpop.permute.xlu0 %614
      %v617 = vmul.f32 %v613, %v615
      %618 = vrot.lane.b32.xlu0 %v455, 32
      %v619 = vpop.permute.xlu0 %618
      %v621 = vadd.f32 %v617, %v619
      %623 = vrot.lane.b32.xlu0 %v592, 32
      %v624 = vpop.permute.xlu0 %623
      %626 = vst.msk [vmem:[%s416] sm:$0xff] %vm458, %v624
      %v627 = vsel %vm458, %v624, 0
      %629 = vmatprep.subr.mxu0 0.0
      %630 = vmatpush1.msra.mxu0 %v428
      %631 = vmatprep.subr.mxu0 0.0
      %632 = vmatpush1.msra.mxu0 %v429
      %633 = vmatprep.subr.mxu0 0.0
      %634 = vmatpush1.msra.mxu0 %v430
      %635 = vmatprep.subr.mxu0 0.0
      %636 = vmatpush1.msra.mxu0 %v431
      %637 = vmatprep.subr.mxu0 0.0
      %638 = vmatpush1.msra.mxu0 0.0
      %639 = vmatprep.subr.mxu0 0.0
      %640 = vmatpush1.msra.mxu0 0.0
      %641 = vmatprep.subr.mxu0 0.0
      %642 = vmatpush1.msra.mxu0 0.0
      %643 = vmatprep.subr.mxu0 0.0
      %644 = vmatpush1.msra.mxu0 0.0
      %645 = vmatprep.subr.mxu0 0.0
      %646 = vmatpush1.msra.mxu0 0.0
      %647 = vmatprep.subr.mxu0 0.0
      %648 = vmatpush1.msra.mxu0 0.0
      %649 = vmatprep.subr.mxu0 0.0
      %650 = vmatpush1.msra.mxu0 0.0
      %651 = vmatprep.subr.mxu0 0.0
      %652 = vmatpush1.msra.mxu0 0.0
      %653 = vmatprep.subr.mxu0 0.0
      %654 = vmatpush1.msra.mxu0 0.0
      %655 = vmatprep.subr.mxu0 0.0
      %656 = vmatpush1.msra.mxu0 0.0
      %657 = vmatprep.subr.mxu0 0.0
      %658 = vmatpush1.msra.mxu0 0.0
      %659 = vmatprep.subr.mxu0 0.0
      %660 = vmatpush1.msra.mxu0 0.0
      %661 = vmatprep.subr.mxu0 0.0
      %662 = vmatpush1.msra.mxu0 0.0
      %663 = vmatprep.subr.mxu0 0.0
      %664 = vmatpush1.msra.mxu0 0.0
      %665 = vmatprep.subr.mxu0 0.0
      %666 = vmatpush1.msra.mxu0 0.0
      %667 = vmatprep.subr.mxu0 0.0
      %668 = vmatpush1.msra.mxu0 0.0
      %669 = vmatprep.subr.mxu0 0.0
      %670 = vmatpush1.msra.mxu0 0.0
      %671 = vmatprep.subr.mxu0 0.0
      %672 = vmatpush1.msra.mxu0 0.0
      %673 = vmatprep.subr.mxu0 0.0
      %674 = vmatpush1.msra.mxu0 0.0
      %675 = vmatprep.subr.mxu0 0.0
      %676 = vmatpush1.msra.mxu0 0.0
      %677 = vmatprep.subr.mxu0 0.0
      %678 = vmatpush1.msra.mxu0 0.0
      %679 = vmatprep.subr.mxu0 0.0
      %680 = vmatpush1.msra.mxu0 0.0
      %681 = vmatprep.subr.mxu0 0.0
      %682 = vmatpush1.msra.mxu0 0.0
      %683 = vmatprep.subr.mxu0 0.0
      %684 = vmatpush1.msra.mxu0 0.0
      %685 = vmatprep.subr.mxu0 0.0
      %686 = vmatpush1.msra.mxu0 0.0
      %687 = vmatprep.subr.mxu0 0.0
      %688 = vmatpush1.msra.mxu0 0.0
      %689 = vmatprep.subr.mxu0 0.0
      %690 = vmatpush1.msra.mxu0 0.0
      %691 = vmatprep.subr.mxu0 0.0
      %692 = vmatpush1.msra.mxu0 0.0
      %693 = vmatprep.mubr.f32.mxu0 0.0
      %694 = vmatmul.mubr.f32.gmra.mrb[0].mxu0 %v627
      %v695 = vpop.f32.mrb[0].mxu0
      %v696 = vadd.f32 0.0, %v695
      %v697 = vpop.f32.mrb[0].mxu0
      %698 = vdwg.mxu0
      %v699 = vmul.f32 %v427, %v696
      %s700 = scalar_lea.vmem %s395, 8
      %v701 = vld [vmem:[%s700] sm:$0xff]
      %v702 = vadd.f32 %v699, %v701
      %v703 = vxor.u32 %v702, 2147483648
      %v704 = vmul.f32 %v703, 1.442695
      %v705 = vpow.pop %v704
      %v706 = vadd.f32 %v705, 1.0
      %v707 = vrcp.pop %v706
      %v708 = vmul.f32 1.0, %v707
      %v709 = vtanh.pop %v702
      %v710 = vmul.f32 %v708, %v621
      %712 = vrot.lane.b32.xlu0 %v709, 64
      %v713 = vpop.permute.xlu0 %712
      %v715 = vmul.f32 %v708, %v713
      %717 = vrot.lane.b32.xlu0 %v715, 32
      %v718 = vpop.permute.xlu0 %717
      %v720 = vadd.f32 %v710, %v718
      %v721 = vtanh.pop %v720
      %723 = vrot.lane.b32.xlu0 %v721, 64
      %v724 = vpop.permute.xlu0 %723
      %v726 = vmul.f32 %v708, %v724
      %728 = vrot.lane.b32.xlu0 %v726, 32
      %v729 = vpop.permute.xlu0 %728
      %v731 = vsel %vm458, %v729, 0.0
      %732 = vadd.xlane.f32.xlu0 %v731
      %v733 = vpop.xlane.xlu0 %732
      %v734 = vmul.f32 %v733, %v570
      %v735 = vsub.f32 %v726, %v734
      %v736 = vmul.f32 %v735, %v735
      %738 = vrot.lane.b32.xlu0 %v736, 32
      %v739 = vpop.permute.xlu0 %738
      %v741 = vsel %vm458, %v739, 0.0
      %742 = vadd.xlane.f32.xlu0 %v741
      %v743 = vpop.xlane.xlu0 %742
      %v744 = vmul.f32 %v743, %v570
      %v745 = vadd.f32 %v744, 1e-05
      %v746 = vrsqrt.pop %v745
      %v747 = vmul.f32 %v735, %v746
      %v748 = vmul.f32 %v747, %v586
      %v749 = vadd.f32 %v748, %v590
      %751 = vrot.lane.b32.xlu0 %v720, 96
      %v752 = vpop.permute.xlu0 %751
      %v754 = vsel %vm458, %v752, 0.0
      %755 = vadd.xlane.f32.xlu0 %v754
      %v756 = vpop.xlane.xlu0 %755
      %v757 = vmul.f32 %v756, %v570
      %v758 = vsub.f32 %v720, %v757
      %v759 = vmul.f32 %v758, %v758
      %761 = vrot.lane.b32.xlu0 %v759, 96
      %v762 = vpop.permute.xlu0 %761
      %v764 = vsel %vm458, %v762, 0.0
      %765 = vadd.xlane.f32.xlu0 %v764
      %v766 = vpop.xlane.xlu0 %765
      %v767 = vmul.f32 %v766, %v570
      %v768 = vadd.f32 %v767, 1e-05
      %v769 = vrsqrt.pop %v768
      %v770 = vmul.f32 %v758, %v769
      %v771 = vmul.f32 %v770, %v615
      %v772 = vadd.f32 %v771, %v619
      %774 = vrot.lane.b32.xlu0 %v749, 32
      %v775 = vpop.permute.xlu0 %774
      %s777 = scalar_lea.vmem %s416, 8
      %778 = vst.msk [vmem:[%s777] sm:$0xff] %vm458, %v775
      %v779 = vsel %vm458, %v775, 0
      %781 = vmatprep.subr.mxu0 0.0
      %782 = vmatpush1.msra.mxu0 %v428
      %783 = vmatprep.subr.mxu0 0.0
      %784 = vmatpush1.msra.mxu0 %v429
      %785 = vmatprep.subr.mxu0 0.0
      %786 = vmatpush1.msra.mxu0 %v430
      %787 = vmatprep.subr.mxu0 0.0
      %788 = vmatpush1.msra.mxu0 %v431
      %789 = vmatprep.subr.mxu0 0.0
      %790 = vmatpush1.msra.mxu0 0.0
      %791 = vmatprep.subr.mxu0 0.0
      %792 = vmatpush1.msra.mxu0 0.0
      %793 = vmatprep.subr.mxu0 0.0
      %794 = vmatpush1.msra.mxu0 0.0
      %795 = vmatprep.subr.mxu0 0.0
      %796 = vmatpush1.msra.mxu0 0.0
      %797 = vmatprep.subr.mxu0 0.0
      %798 = vmatpush1.msra.mxu0 0.0
      %799 = vmatprep.subr.mxu0 0.0
      %800 = vmatpush1.msra.mxu0 0.0
      %801 = vmatprep.subr.mxu0 0.0
      %802 = vmatpush1.msra.mxu0 0.0
      %803 = vmatprep.subr.mxu0 0.0
      %804 = vmatpush1.msra.mxu0 0.0
      %805 = vmatprep.subr.mxu0 0.0
      %806 = vmatpush1.msra.mxu0 0.0
      %807 = vmatprep.subr.mxu0 0.0
      %808 = vmatpush1.msra.mxu0 0.0
      %809 = vmatprep.subr.mxu0 0.0
      %810 = vmatpush1.msra.mxu0 0.0
      %811 = vmatprep.subr.mxu0 0.0
      %812 = vmatpush1.msra.mxu0 0.0
      %813 = vmatprep.subr.mxu0 0.0
      %814 = vmatpush1.msra.mxu0 0.0
      %815 = vmatprep.subr.mxu0 0.0
      %816 = vmatpush1.msra.mxu0 0.0
      %817 = vmatprep.subr.mxu0 0.0
      %818 = vmatpush1.msra.mxu0 0.0
      %819 = vmatprep.subr.mxu0 0.0
      %820 = vmatpush1.msra.mxu0 0.0
      %821 = vmatprep.subr.mxu0 0.0
      %822 = vmatpush1.msra.mxu0 0.0
      %823 = vmatprep.subr.mxu0 0.0
      %824 = vmatpush1.msra.mxu0 0.0
      %825 = vmatprep.subr.mxu0 0.0
      %826 = vmatpush1.msra.mxu0 0.0
      %827 = vmatprep.subr.mxu0 0.0
      %828 = vmatpush1.msra.mxu0 0.0
      %829 = vmatprep.subr.mxu0 0.0
      %830 = vmatpush1.msra.mxu0 0.0
      %831 = vmatprep.subr.mxu0 0.0
      %832 = vmatpush1.msra.mxu0 0.0
      %833 = vmatprep.subr.mxu0 0.0
      %834 = vmatpush1.msra.mxu0 0.0
      %835 = vmatprep.subr.mxu0 0.0
      %836 = vmatpush1.msra.mxu0 0.0
      %837 = vmatprep.subr.mxu0 0.0
      %838 = vmatpush1.msra.mxu0 0.0
      %839 = vmatprep.subr.mxu0 0.0
      %840 = vmatpush1.msra.mxu0 0.0
      %841 = vmatprep.subr.mxu0 0.0
      %842 = vmatpush1.msra.mxu0 0.0
      %843 = vmatprep.subr.mxu0 0.0
      %844 = vmatpush1.msra.mxu0 0.0
      %845 = vmatprep.mubr.f32.mxu0 0.0
      %846 = vmatmul.mubr.f32.gmra.mrb[0].mxu0 %v779
      %v847 = vpop.f32.mrb[0].mxu0
      %v848 = vadd.f32 0.0, %v847
      %v849 = vpop.f32.mrb[0].mxu0
      %850 = vdwg.mxu0
      %v851 = vmul.f32 %v427, %v848
      %s852 = scalar_lea.vmem %s395, 16
      %v853 = vld [vmem:[%s852] sm:$0xff]
      %v854 = vadd.f32 %v851, %v853
      %v855 = vxor.u32 %v854, 2147483648
      %v856 = vmul.f32 %v855, 1.442695
      %v857 = vpow.pop %v856
      %v858 = vadd.f32 %v857, 1.0
      %v859 = vrcp.pop %v858
      %v860 = vmul.f32 1.0, %v859
      %v861 = vtanh.pop %v854
      %v862 = vmul.f32 %v860, %v772
      %864 = vrot.lane.b32.xlu0 %v861, 64
      %v865 = vpop.permute.xlu0 %864
      %v867 = vmul.f32 %v860, %v865
      %869 = vrot.lane.b32.xlu0 %v867, 32
      %v870 = vpop.permute.xlu0 %869
      %v872 = vadd.f32 %v862, %v870
      %v873 = vtanh.pop %v872
      %875 = vrot.lane.b32.xlu0 %v873, 64
      %v876 = vpop.permute.xlu0 %875
      %v878 = vmul.f32 %v860, %v876
      %880 = vrot.lane.b32.xlu0 %v878, 32
      %v881 = vpop.permute.xlu0 %880
      %v883 = vsel %vm458, %v881, 0.0
      %884 = vadd.xlane.f32.xlu0 %v883
      %v885 = vpop.xlane.xlu0 %884
      %v886 = vmul.f32 %v885, %v570
      %v887 = vsub.f32 %v878, %v886
      %v888 = vmul.f32 %v887, %v887
      %890 = vrot.lane.b32.xlu0 %v888, 32
      %v891 = vpop.permute.xlu0 %890
      %v893 = vsel %vm458, %v891, 0.0
      %894 = vadd.xlane.f32.xlu0 %v893
      %v895 = vpop.xlane.xlu0 %894
      %v896 = vmul.f32 %v895, %v570
      %v897 = vadd.f32 %v896, 1e-05
      %v898 = vrsqrt.pop %v897
      %v899 = vmul.f32 %v887, %v898
      %v900 = vmul.f32 %v899, %v586
      %v901 = vadd.f32 %v900, %v590
      %903 = vrot.lane.b32.xlu0 %v872, 96
      %v904 = vpop.permute.xlu0 %903
      %v906 = vsel %vm458, %v904, 0.0
      %907 = vadd.xlane.f32.xlu0 %v906
      %v908 = vpop.xlane.xlu0 %907
      %v909 = vmul.f32 %v908, %v570
      %v910 = vsub.f32 %v872, %v909
      %v911 = vmul.f32 %v910, %v910
      %913 = vrot.lane.b32.xlu0 %v911, 96
      %v914 = vpop.permute.xlu0 %913
      %v916 = vsel %vm458, %v914, 0.0
      %917 = vadd.xlane.f32.xlu0 %v916
      %v918 = vpop.xlane.xlu0 %917
      %v919 = vmul.f32 %v918, %v570
      %v920 = vadd.f32 %v919, 1e-05
      %v921 = vrsqrt.pop %v920
      %v922 = vmul.f32 %v910, %v921
      %v923 = vmul.f32 %v922, %v615
      %v924 = vadd.f32 %v923, %v619
      %926 = vrot.lane.b32.xlu0 %v901, 32
      %v927 = vpop.permute.xlu0 %926
      %s929 = scalar_lea.vmem %s416, 16
      %930 = vst.msk [vmem:[%s929] sm:$0xff] %vm458, %v927
      %v931 = vsel %vm458, %v927, 0
      %933 = vmatprep.subr.mxu0 0.0
      %934 = vmatpush1.msra.mxu0 %v428
      %935 = vmatprep.subr.mxu0 0.0
      %936 = vmatpush1.msra.mxu0 %v429
      %937 = vmatprep.subr.mxu0 0.0
      %938 = vmatpush1.msra.mxu0 %v430
      %939 = vmatprep.subr.mxu0 0.0
      %940 = vmatpush1.msra.mxu0 %v431
      %941 = vmatprep.subr.mxu0 0.0
      %942 = vmatpush1.msra.mxu0 0.0
      %943 = vmatprep.subr.mxu0 0.0
      %944 = vmatpush1.msra.mxu0 0.0
      %945 = vmatprep.subr.mxu0 0.0
      %946 = vmatpush1.msra.mxu0 0.0
      %947 = vmatprep.subr.mxu0 0.0
      %948 = vmatpush1.msra.mxu0 0.0
      %949 = vmatprep.subr.mxu0 0.0
      %950 = vmatpush1.msra.mxu0 0.0
      %951 = vmatprep.subr.mxu0 0.0
      %952 = vmatpush1.msra.mxu0 0.0
      %953 = vmatprep.subr.mxu0 0.0
      %954 = vmatpush1.msra.mxu0 0.0
      %955 = vmatprep.subr.mxu0 0.0
      %956 = vmatpush1.msra.mxu0 0.0
      %957 = vmatprep.subr.mxu0 0.0
      %958 = vmatpush1.msra.mxu0 0.0
      %959 = vmatprep.subr.mxu0 0.0
      %960 = vmatpush1.msra.mxu0 0.0
      %961 = vmatprep.subr.mxu0 0.0
      %962 = vmatpush1.msra.mxu0 0.0
      %963 = vmatprep.subr.mxu0 0.0
      %964 = vmatpush1.msra.mxu0 0.0
      %965 = vmatprep.subr.mxu0 0.0
      %966 = vmatpush1.msra.mxu0 0.0
      %967 = vmatprep.subr.mxu0 0.0
      %968 = vmatpush1.msra.mxu0 0.0
      %969 = vmatprep.subr.mxu0 0.0
      %970 = vmatpush1.msra.mxu0 0.0
      %971 = vmatprep.subr.mxu0 0.0
      %972 = vmatpush1.msra.mxu0 0.0
      %973 = vmatprep.subr.mxu0 0.0
      %974 = vmatpush1.msra.mxu0 0.0
      %975 = vmatprep.subr.mxu0 0.0
      %976 = vmatpush1.msra.mxu0 0.0
      %977 = vmatprep.subr.mxu0 0.0
      %978 = vmatpush1.msra.mxu0 0.0
      %979 = vmatprep.subr.mxu0 0.0
      %980 = vmatpush1.msra.mxu0 0.0
      %981 = vmatprep.subr.mxu0 0.0
      %982 = vmatpush1.msra.mxu0 0.0
      %983 = vmatprep.subr.mxu0 0.0
      %984 = vmatpush1.msra.mxu0 0.0
      %985 = vmatprep.subr.mxu0 0.0
      %986 = vmatpush1.msra.mxu0 0.0
      %987 = vmatprep.subr.mxu0 0.0
      %988 = vmatpush1.msra.mxu0 0.0
      %989 = vmatprep.subr.mxu0 0.0
      %990 = vmatpush1.msra.mxu0 0.0
      %991 = vmatprep.subr.mxu0 0.0
      %992 = vmatpush1.msra.mxu0 0.0
      %993 = vmatprep.subr.mxu0 0.0
      %994 = vmatpush1.msra.mxu0 0.0
      %995 = vmatprep.subr.mxu0 0.0
      %996 = vmatpush1.msra.mxu0 0.0
      %997 = vmatprep.mubr.f32.mxu0 0.0
      %998 = vmatmul.mubr.f32.gmra.mrb[0].mxu0 %v931
      %v999 = vpop.f32.mrb[0].mxu0
      %v1000 = vadd.f32 0.0, %v999
      %v1001 = vpop.f32.mrb[0].mxu0
      %1002 = vdwg.mxu0
      %v1003 = vmul.f32 %v427, %v1000
      %s1004 = scalar_lea.vmem %s395, 24
      %v1005 = vld [vmem:[%s1004] sm:$0xff]
      %v1006 = vadd.f32 %v1003, %v1005
      %v1007 = vxor.u32 %v1006, 2147483648
      %v1008 = vmul.f32 %v1007, 1.442695
      %v1009 = vpow.pop %v1008
      %v1010 = vadd.f32 %v1009, 1.0
      %v1011 = vrcp.pop %v1010
      %v1012 = vmul.f32 1.0, %v1011
      %v1013 = vtanh.pop %v1006
      %v1014 = vmul.f32 %v1012, %v924
      %1016 = vrot.lane.b32.xlu0 %v1013, 64
      %v1017 = vpop.permute.xlu0 %1016
      %v1019 = vmul.f32 %v1012, %v1017
      %1021 = vrot.lane.b32.xlu0 %v1019, 32
      %v1022 = vpop.permute.xlu0 %1021
      %v1024 = vadd.f32 %v1014, %v1022
      %v1025 = vtanh.pop %v1024
      %1027 = vrot.lane.b32.xlu0 %v1025, 64
      %v1028 = vpop.permute.xlu0 %1027
      %v1030 = vmul.f32 %v1012, %v1028
      %1032 = vrot.lane.b32.xlu0 %v1030, 32
      %v1033 = vpop.permute.xlu0 %1032
      %v1035 = vsel %vm458, %v1033, 0.0
      %1036 = vadd.xlane.f32.xlu0 %v1035
      %v1037 = vpop.xlane.xlu0 %1036
      %v1038 = vmul.f32 %v1037, %v570
      %v1039 = vsub.f32 %v1030, %v1038
      %v1040 = vmul.f32 %v1039, %v1039
      %1042 = vrot.lane.b32.xlu0 %v1040, 32
      %v1043 = vpop.permute.xlu0 %1042
      %v1045 = vsel %vm458, %v1043, 0.0
      %1046 = vadd.xlane.f32.xlu0 %v1045
      %v1047 = vpop.xlane.xlu0 %1046
      %v1048 = vmul.f32 %v1047, %v570
      %v1049 = vadd.f32 %v1048, 1e-05
      %v1050 = vrsqrt.pop %v1049
      %v1051 = vmul.f32 %v1039, %v1050
      %v1052 = vmul.f32 %v1051, %v586
      %v1053 = vadd.f32 %v1052, %v590
      %1055 = vrot.lane.b32.xlu0 %v1024, 96
      %v1056 = vpop.permute.xlu0 %1055
      %v1058 = vsel %vm458, %v1056, 0.0
      %1059 = vadd.xlane.f32.xlu0 %v1058
      %v1060 = vpop.xlane.xlu0 %1059
      %v1061 = vmul.f32 %v1060, %v570
      %v1062 = vsub.f32 %v1024, %v1061
      %v1063 = vmul.f32 %v1062, %v1062
      %1065 = vrot.lane.b32.xlu0 %v1063, 96
      %v1066 = vpop.permute.xlu0 %1065
      %v1068 = vsel %vm458, %v1066, 0.0
      %1069 = vadd.xlane.f32.xlu0 %v1068
      %v1070 = vpop.xlane.xlu0 %1069
      %v1071 = vmul.f32 %v1070, %v570
      %v1072 = vadd.f32 %v1071, 1e-05
      %v1073 = vrsqrt.pop %v1072
      %v1074 = vmul.f32 %v1062, %v1073
      %v1075 = vmul.f32 %v1074, %v615
      %v1076 = vadd.f32 %v1075, %v619
      %1078 = vrot.lane.b32.xlu0 %v1053, 32
      %v1079 = vpop.permute.xlu0 %1078
      %s1081 = scalar_lea.vmem %s416, 24
      %1082 = vst.msk [vmem:[%s1081] sm:$0xff] %vm458, %v1079
      %1083 = vst.msk [vmem:[#allocation2] sm:$0xff] %vm458, %v1079
      %1085 = vrot.lane.b32.xlu0 %v1076, 96
      %v1086 = vpop.permute.xlu0 %1085
      %1088 = vst.msk [vmem:[#allocation3] sm:$0xff] %vm458, %v1086
      %s1089 = smul.u32 4, %s25
      %p1090 = scmp.lt.s32.totalorder %s1089, 7
      %s1091 = scalar_select %p1090, %s1089, 7
      %p1092 = scmp.lt.s32.totalorder %s24, 0
      %s1093 = scalar_select %p1092, %s24, 0
      %s1094 = sadd.s32 %s1093, %s1091
      %s1095 = smul.addr %s1094, 8
      %s1096 = scalar_lea.vmem %s9, %s1095
      // Predicated region
      $region61: #{inference_rnn_lstm.1} parent=55 // pred_check
        %p1097 = pneg %p263
      $region62: #{inference_rnn_lstm.1} parent=55 // pred_check_branch
        %1099 = sbr.rel (%p1097) target = $region64
      $region63: #{inference_rnn_lstm.1} parent=55 // pred_region
        %s1100 = smul.u32 4, %s25
      $region64: #{inference_rnn_lstm.1} parent=55 // pred_fallthru
        _
    $region56: #{inference_rnn_lstm.1} parent=5 // pred_fallthru
      _
    %p1101 = scmp.le.s32.totalorder 2, %s15
    // Predicated region
    $region65: #{inference_rnn_lstm.1} parent=5 // pred_check
      %p1102 = pneg %p1101
    $region66: #{inference_rnn_lstm.1} parent=5 // pred_check_branch
      %1104 = sbr.rel (%p1102) target = $region68
    $region67: #{inference_rnn_lstm.1} parent=5 // pred_region
      %s1105 = ssub.s32 %s15, 2
      // Predicated region
      $region69: #{inference_rnn_lstm.1} parent=67 // pred_check
        %p1106 = pneg %p269
      $region70: #{inference_rnn_lstm.1} parent=67 // pred_check_branch
        %1108 = sbr.rel (%p1106) target = $region72
      $region71: #{inference_rnn_lstm.1} parent=67 // pred_region
        %s1109 = smul.u32 4, %s27
        %p1110 = scmp.lt.s32.totalorder %s1109, 7
        %s1111 = scalar_select %p1110, %s1109, 7
        %p1112 = scmp.lt.s32.totalorder %s26, 0
        %s1113 = scalar_select %p1112, %s26, 0
        %s1114 = sadd.s32 %s1113, %s1111
        %s1115 = smul.addr %s1114, 8
        %s1116 = scalar_lea.vmem %s9, %s1115
      $region72: #{inference_rnn_lstm.1} parent=67 // pred_fallthru
        _
    $region68: #{inference_rnn_lstm.1} parent=5 // pred_fallthru
      _
  $region6: #{inference_rnn_lstm.1} parent=0 // loop_footer
    %s19 = sadd.s32 1, %s15
  $region7: #{inference_rnn_lstm.1} parent=0 // loop_footer_branch
    %14 = sbr.rel target = $region3
  $region8: #{inference_rnn_lstm.1} parent=0 // loop_exit
    _

</llo_original>
